<compile_context>
chip_gen: v6e
topology: v6e:2x2x1
jax: 0.10.0
libtpu: 0.0.40
codegen_flags: <defaults>
</compile_context>

<pallas_src>
import jax
import jax.numpy as jnp
from jax.experimental import pallas as pl
from jax.experimental.pallas import tpu as pltpu

# ----- problem sizes (small, consistent with the module) -----
B, N, C = 2, 8, 32          # batch, tokens, embed dim
NUM_HEADS = 4
HEAD_DIM = C // NUM_HEADS
MLP_HIDDEN = int(C * 4.0)   # mlp_ratio = 4.0
LN_EPS = 1e-5
SCALE = HEAD_DIM ** (-0.5)

# Plain Python floats only (jaxpr literals) -- no captured jnp constants.
_INV_SQRT2 = 0.7071067811865476


def _layernorm(x, w, b):
    mu = jnp.mean(x, axis=-1, keepdims=True)
    var = jnp.mean((x - mu) ** 2, axis=-1, keepdims=True)
    return (x - mu) * jax.lax.rsqrt(var + LN_EPS) * w + b


def _erf(x):
    # Abramowitz & Stegun 7.1.26 rational approximation (|err| < 1.5e-7).
    # Built from exp/mul/add/where only -> guaranteed Mosaic lowering.
    a1, a2, a3, a4, a5 = (0.254829592, -0.284496736, 1.421413741,
                          -1.453152027, 1.061405429)
    pc = 0.3275911
    sgn = jnp.where(x < 0.0, -1.0, 1.0)
    ax = jnp.abs(x)
    t = 1.0 / (1.0 + pc * ax)
    poly = ((((a5 * t + a4) * t + a3) * t + a2) * t + a1) * t
    return sgn * (1.0 - poly * jnp.exp(-(ax * ax)))


def _gelu(x):
    # exact-erf GELU (matches the module's nn.GELU() default)
    return 0.5 * x * (1.0 + _erf(x * _INV_SQRT2))


def block_kernel(x_ref,
                 ln1w_ref, ln1b_ref,
                 wqkv_ref, wproj_ref, bproj_ref,
                 ln2w_ref, ln2b_ref,
                 w1_ref, b1_ref, w2_ref, b2_ref,
                 o_ref,
                 attn_scratch):
    x = x_ref[0]                                     # (N, C) -- one batch element

    # ---------- attention branch (per-batch (N,N) scores, no mask needed) ----------
    xn = _layernorm(x, ln1w_ref[0], ln1b_ref[0])
    # softmax scale is pre-folded into the Q columns of wqkv (once, at init).
    qkv = jnp.dot(xn, wqkv_ref[...], preferred_element_type=jnp.float32)   # (N, 3C)

    # TODO(synk): with many heads / long sequences use lax.fori_loop (or a grid
    # axis over heads) instead of this static unrolled loop.
    for h in range(NUM_HEADS):
        q_h = qkv[:, h * HEAD_DIM:(h + 1) * HEAD_DIM]
        k_h = qkv[:, C + h * HEAD_DIM:C + (h + 1) * HEAD_DIM]
        v_h = qkv[:, 2 * C + h * HEAD_DIM:2 * C + (h + 1) * HEAD_DIM]

        # scores: contract on HEAD_DIM directly (no materialized transpose)
        s = jax.lax.dot_general(q_h, k_h, (((1,), (1,)), ((), ())),
                                preferred_element_type=jnp.float32)        # (N, N)
        s = s - jnp.max(s, axis=-1, keepdims=True)
        p = jnp.exp(s)
        p = p * pl.reciprocal(jnp.sum(p, axis=-1, keepdims=True), approx=True)

        # Stage the head output; all heads are then consumed as ONE (N, C)
        # operand so the output projection is a single K=C matmul.
        attn_scratch[:, h * HEAD_DIM:(h + 1) * HEAD_DIM] = jnp.dot(
            p, v_h, preferred_element_type=jnp.float32)

    attn = jnp.dot(attn_scratch[...], wproj_ref[...],
                   preferred_element_type=jnp.float32) + bproj_ref[0]
    y1 = x + attn                                    # residual 1

    # ---------- MLP branch (GELU after BOTH fc layers, per the module) ----------
    yn = _layernorm(y1, ln2w_ref[0], ln2b_ref[0])
    h1 = _gelu(jnp.dot(yn, w1_ref[...], preferred_element_type=jnp.float32) + b1_ref[0])
    h2 = _gelu(jnp.dot(h1, w2_ref[...], preferred_element_type=jnp.float32) + b2_ref[0])

    o_ref[0] = y1 + h2                               # residual 2


def prepare_params(params):
    """One-time (init-time) transform: fold the softmax scale into the Q columns
    of the qkv weight so the per-call path carries no extra weight copy."""
    (ln1w, ln1b, wqkv, wproj, bproj, ln2w, ln2b, w1, b1, w2, b2) = params
    wqkv_scaled = wqkv.at[:, :C].multiply(SCALE)
    return (ln1w, ln1b, wqkv_scaled, wproj, bproj, ln2w, ln2b, w1, b1, w2, b2)


def vit_block(x, prepared_params):
    (ln1w, ln1b, wqkv, wproj, bproj, ln2w, ln2b, w1, b1, w2, b2) = prepared_params

    w2d = lambda b: (0, 0)   # all weights/biases are 2-D, resident across the grid
    in_specs = [
        pl.BlockSpec((1, N, C), lambda b: (b, 0, 0)),   # x
        pl.BlockSpec((1, C), w2d),                      # ln1w
        pl.BlockSpec((1, C), w2d),                      # ln1b
        pl.BlockSpec((C, 3 * C), w2d),                  # wqkv (scale-folded)
        pl.BlockSpec((C, C), w2d),                      # wproj
        pl.BlockSpec((1, C), w2d),                      # bproj
        pl.BlockSpec((1, C), w2d),                      # ln2w
        pl.BlockSpec((1, C), w2d),                      # ln2b
        pl.BlockSpec((C, MLP_HIDDEN), w2d),             # w1
        pl.BlockSpec((1, MLP_HIDDEN), w2d),             # b1
        pl.BlockSpec((MLP_HIDDEN, C), w2d),             # w2
        pl.BlockSpec((1, C), w2d),                      # b2
    ]

    return pl.pallas_call(
        block_kernel,
        out_shape=jax.ShapeDtypeStruct((B, N, C), jnp.float32),
        grid=(B,),
        in_specs=in_specs,
        out_specs=pl.BlockSpec((1, N, C), lambda b: (b, 0, 0)),
        scratch_shapes=[pltpu.VMEM((N, C), jnp.float32)],
        compiler_params=pltpu.CompilerParams(
            dimension_semantics=("parallel",)),          # v7x: batch across 2 TCs
    )(x, ln1w, ln1b, wqkv, wproj, bproj, ln2w, ln2b, w1, b1, w2, b2)


def reference_block(x, params):
    (ln1w, ln1b, wqkv, wproj, bproj, ln2w, ln2b, w1, b1, w2, b2) = params
    ln1w, ln1b = ln1w[0], ln1b[0]
    ln2w, ln2b = ln2w[0], ln2b[0]

    def ln(v, w, b):
        mu = jnp.mean(v, -1, keepdims=True)
        var = jnp.mean((v - mu) ** 2, -1, keepdims=True)
        return (v - mu) / jnp.sqrt(var + LN_EPS) * w + b

    xn = ln(x, ln1w, ln1b)
    qkv = xn @ wqkv                                         # (B, N, 3C)
    qkv = qkv.reshape(B, N, 3, NUM_HEADS, HEAD_DIM).transpose(2, 0, 3, 1, 4)
    q, k, v = qkv[0], qkv[1], qkv[2]                        # (B, H, N, hd)
    att = jnp.einsum("bhnd,bhmd->bhnm", q, k) * SCALE
    att = jax.nn.softmax(att, axis=-1)
    o = jnp.einsum("bhnm,bhmd->bhnd", att, v)
    o = o.transpose(0, 2, 1, 3).reshape(B, N, C)
    o = o @ wproj + bproj[0]
    y1 = x + o
    yn = ln(y1, ln2w, ln2b)
    h1 = jax.nn.gelu(yn @ w1 + b1[0], approximate=False)
    h2 = jax.nn.gelu(h1 @ w2 + b2[0], approximate=False)
    return y1 + h2


def init_params(key):
    ks = jax.random.split(key, 8)
    ln1w = jnp.ones((1, C), jnp.float32)
    ln1b = jnp.zeros((1, C), jnp.float32)
    ln2w = jnp.ones((1, C), jnp.float32)
    ln2b = jnp.zeros((1, C), jnp.float32)
    # Linear weights stored pre-transposed as (in, out) so kernel does x @ W
    wqkv = jax.random.normal(ks[0], (C, 3 * C), jnp.float32) * 0.05     # qkv_bias=False
    wproj = jax.random.normal(ks[1], (C, C), jnp.float32) * 0.05
    bproj = jax.random.normal(ks[2], (1, C), jnp.float32) * 0.01
    w1 = jax.random.normal(ks[3], (C, MLP_HIDDEN), jnp.float32) * 0.05  # xavier-ish
    b1 = jax.random.normal(ks[4], (1, MLP_HIDDEN), jnp.float32) * 1e-6
    w2 = jax.random.normal(ks[5], (MLP_HIDDEN, C), jnp.float32) * 0.05
    b2 = jax.random.normal(ks[6], (1, C), jnp.float32) * 1e-6
    return (ln1w, ln1b, wqkv, wproj, bproj, ln2w, ln2b, w1, b1, w2, b2)


if __name__ == "__main__":
    key = jax.random.PRNGKey(0)
    kx, kp = jax.random.split(key)
    x = jax.random.normal(kx, (B, N, C), jnp.float32)
    params = init_params(kp)
    prepared = prepare_params(params)       # one-time scale fold, off the call path

    out = vit_block(x, prepared)
    out = jax.block_until_ready(out)

    ref = reference_block(x, params)
    assert out.shape == (B, N, C)
    # 1e-3 tolerance: the softmax denominator uses the EUP approximate reciprocal
    # (pl.reciprocal(approx=True)); erf polynomial error is <2e-7; rest is exact f32.
    assert jnp.allclose(out, ref, atol=1e-3, rtol=1e-3), (
        f"max err {jnp.max(jnp.abs(out - ref))}")
    print("KERNEL_OK")
</pallas_src>

<mosaic_0001>
module attributes {stable_mosaic.version = 11 : i64} {
  func.func @block_kernel(%arg0: i32, %arg1: memref<1x8x32xf32, #tpu.memory_space<vmem>>, %arg2: memref<1x32xf32, #tpu.memory_space<vmem>>, %arg3: memref<1x32xf32, #tpu.memory_space<vmem>>, %arg4: memref<32x96xf32, #tpu.memory_space<vmem>>, %arg5: memref<32x32xf32, #tpu.memory_space<vmem>>, %arg6: memref<1x32xf32, #tpu.memory_space<vmem>>, %arg7: memref<1x32xf32, #tpu.memory_space<vmem>>, %arg8: memref<1x32xf32, #tpu.memory_space<vmem>>, %arg9: memref<32x128xf32, #tpu.memory_space<vmem>>, %arg10: memref<1x128xf32, #tpu.memory_space<vmem>>, %arg11: memref<128x32xf32, #tpu.memory_space<vmem>>, %arg12: memref<1x32xf32, #tpu.memory_space<vmem>>, %arg13: memref<1x8x32xf32, #tpu.memory_space<vmem>>, %arg14: memref<8x32xf32, #tpu.memory_space<vmem>>) attributes {dimension_semantics = [#tpu.dimension_semantics<parallel>], iteration_bounds = array<i64: 2>, scalar_prefetch = 0 : i64, scratch_operands = 1 : i64, tpu.core_type = #tpu.core_type<tc>, window_params = [{transform_indices = @transform_0, window_bounds = array<i64: 1, 8, 32>}, {pipeline_mode = #tpu.pipeline_mode<synchronous>, transform_indices = @transform_1, window_bounds = array<i64: 1, 32>}, {pipeline_mode = #tpu.pipeline_mode<synchronous>, transform_indices = @transform_2, window_bounds = array<i64: 1, 32>}, {pipeline_mode = #tpu.pipeline_mode<synchronous>, transform_indices = @transform_3, window_bounds = array<i64: 32, 96>}, {pipeline_mode = #tpu.pipeline_mode<synchronous>, transform_indices = @transform_4, window_bounds = array<i64: 32, 32>}, {pipeline_mode = #tpu.pipeline_mode<synchronous>, transform_indices = @transform_5, window_bounds = array<i64: 1, 32>}, {pipeline_mode = #tpu.pipeline_mode<synchronous>, transform_indices = @transform_6, window_bounds = array<i64: 1, 32>}, {pipeline_mode = #tpu.pipeline_mode<synchronous>, transform_indices = @transform_7, window_bounds = array<i64: 1, 32>}, {pipeline_mode = #tpu.pipeline_mode<synchronous>, transform_indices = @transform_8, window_bounds = array<i64: 32, 128>}, {pipeline_mode = #tpu.pipeline_mode<synchronous>, transform_indices = @transform_9, window_bounds = array<i64: 1, 128>}, {pipeline_mode = #tpu.pipeline_mode<synchronous>, transform_indices = @transform_10, window_bounds = array<i64: 128, 32>}, {pipeline_mode = #tpu.pipeline_mode<synchronous>, transform_indices = @transform_11, window_bounds = array<i64: 1, 32>}, {transform_indices = @transform_12, window_bounds = array<i64: 1, 8, 32>}]} {
    %c0 = arith.constant 0 : index
    %c0_0 = arith.constant 0 : index
    %c0_1 = arith.constant 0 : index
    %0 = vector.load %arg1[%c0, %c0_0, %c0_1] : memref<1x8x32xf32, #tpu.memory_space<vmem>>, vector<1x8x32xf32>
    %1 = vector.shape_cast %0 : vector<1x8x32xf32> to vector<8x32xf32>
    %c0_2 = arith.constant 0 : index
    %c0_3 = arith.constant 0 : index
    %2 = vector.load %arg2[%c0_2, %c0_3] : memref<1x32xf32, #tpu.memory_space<vmem>>, vector<1x32xf32>
    %3 = vector.shape_cast %2 : vector<1x32xf32> to vector<32xf32>
    %c0_4 = arith.constant 0 : index
    %c0_5 = arith.constant 0 : index
    %4 = vector.load %arg3[%c0_4, %c0_5] : memref<1x32xf32, #tpu.memory_space<vmem>>, vector<1x32xf32>
    %5 = vector.shape_cast %4 : vector<1x32xf32> to vector<32xf32>
    %cst = arith.constant dense<0.000000e+00> : vector<8xf32>
    %6 = vector.multi_reduction <add>, %1, %cst [1] : vector<8x32xf32> to vector<8xf32>
    %7 = vector.shape_cast %6 : vector<8xf32> to vector<8x1xf32>
    %cst_6 = arith.constant 3.200000e+01 : f32
    %8 = vector.broadcast %cst_6 : f32 to vector<8x1xf32>
    %9 = arith.divf %7, %8 : vector<8x1xf32>
    %10 = vector.broadcast %9 : vector<8x1xf32> to vector<8x32xf32>
    %11 = arith.subf %1, %10 : vector<8x32xf32>
    %12 = arith.mulf %11, %11 : vector<8x32xf32>
    %cst_7 = arith.constant dense<0.000000e+00> : vector<8xf32>
    %13 = vector.multi_reduction <add>, %12, %cst_7 [1] : vector<8x32xf32> to vector<8xf32>
    %14 = vector.shape_cast %13 : vector<8xf32> to vector<8x1xf32>
    %cst_8 = arith.constant 3.200000e+01 : f32
    %15 = vector.broadcast %cst_8 : f32 to vector<8x1xf32>
    %16 = arith.divf %14, %15 : vector<8x1xf32>
    %17 = vector.broadcast %9 : vector<8x1xf32> to vector<8x32xf32>
    %18 = arith.subf %1, %17 : vector<8x32xf32>
    %cst_9 = arith.constant 9.99999974E-6 : f32
    %19 = vector.broadcast %cst_9 : f32 to vector<8x1xf32>
    %20 = arith.addf %16, %19 : vector<8x1xf32>
    %21 = math.rsqrt %20 : vector<8x1xf32>
    %22 = vector.broadcast %21 : vector<8x1xf32> to vector<8x32xf32>
    %23 = arith.mulf %18, %22 : vector<8x32xf32>
    %24 = vector.shape_cast %3 : vector<32xf32> to vector<1x32xf32>
    %25 = vector.broadcast %24 : vector<1x32xf32> to vector<8x32xf32>
    %26 = arith.mulf %23, %25 : vector<8x32xf32>
    %27 = vector.shape_cast %5 : vector<32xf32> to vector<1x32xf32>
    %28 = vector.broadcast %27 : vector<1x32xf32> to vector<8x32xf32>
    %29 = arith.addf %26, %28 : vector<8x32xf32>
    %c0_10 = arith.constant 0 : index
    %c0_11 = arith.constant 0 : index
    %30 = vector.load %arg4[%c0_10, %c0_11] : memref<32x96xf32, #tpu.memory_space<vmem>>, vector<32x96xf32>
    %cst_12 = arith.constant dense<0.000000e+00> : vector<8x96xf32>
    %31 = tpu.matmul %29, %30, %cst_12 {dimension_numbers = #tpu.dot_dimension_numbers<[1], [0], [0], [1], [0, 0, 1, 1], [], []>} : vector<8x32xf32>, vector<32x96xf32>, vector<8x96xf32> -> vector<8x96xf32>
    %32 = vector.extract_strided_slice %31 {offsets = [0, 0], sizes = [8, 8], strides = [1, 1]} : vector<8x96xf32> to vector<8x8xf32>
    %33 = vector.extract_strided_slice %31 {offsets = [0, 32], sizes = [8, 8], strides = [1, 1]} : vector<8x96xf32> to vector<8x8xf32>
    %34 = vector.extract_strided_slice %31 {offsets = [0, 64], sizes = [8, 8], strides = [1, 1]} : vector<8x96xf32> to vector<8x8xf32>
    %cst_13 = arith.constant dense<0.000000e+00> : vector<8x8xf32>
    %35 = tpu.matmul %32, %33, %cst_13 {dimension_numbers = #tpu.dot_dimension_numbers<[1], [1], [0], [0], [0, 0, 1, 0], [], []>} : vector<8x8xf32>, vector<8x8xf32>, vector<8x8xf32> -> vector<8x8xf32>
    %cst_14 = arith.constant dense<0xFF800000> : vector<8xf32>
    %36 = vector.multi_reduction <maximumf>, %35, %cst_14 [1] : vector<8x8xf32> to vector<8xf32>
    %37 = vector.shape_cast %36 : vector<8xf32> to vector<8x1xf32>
    %38 = vector.broadcast %37 : vector<8x1xf32> to vector<8x8xf32>
    %39 = arith.subf %35, %38 : vector<8x8xf32>
    %40 = math.exp %39 : vector<8x8xf32>
    %cst_15 = arith.constant dense<0.000000e+00> : vector<8xf32>
    %41 = vector.multi_reduction <add>, %40, %cst_15 [1] : vector<8x8xf32> to vector<8xf32>
    %42 = vector.shape_cast %41 : vector<8xf32> to vector<8x1xf32>
    %43 = tpu.reciprocal %42 {approx = true} : vector<8x1xf32> -> vector<8x1xf32>
    %44 = vector.broadcast %43 : vector<8x1xf32> to vector<8x8xf32>
    %45 = arith.mulf %40, %44 : vector<8x8xf32>
    %cst_16 = arith.constant dense<0.000000e+00> : vector<8x8xf32>
    %46 = tpu.matmul %45, %34, %cst_16 {dimension_numbers = #tpu.dot_dimension_numbers<[1], [0], [0], [1], [0, 0, 1, 1], [], []>} : vector<8x8xf32>, vector<8x8xf32>, vector<8x8xf32> -> vector<8x8xf32>
    %c0_17 = arith.constant 0 : index
    %c0_18 = arith.constant 0 : index
    %47 = vector.load %arg14[%c0_17, %c0_18] : memref<8x32xf32, #tpu.memory_space<vmem>>, vector<8x8xf32>
    tpu.vector_store %arg14[%c0_17, %c0_18], %46 {strides = array<i32>} : memref<8x32xf32, #tpu.memory_space<vmem>>, vector<8x8xf32>,
    %48 = vector.extract_strided_slice %31 {offsets = [0, 8], sizes = [8, 8], strides = [1, 1]} : vector<8x96xf32> to vector<8x8xf32>
    %49 = vector.extract_strided_slice %31 {offsets = [0, 40], sizes = [8, 8], strides = [1, 1]} : vector<8x96xf32> to vector<8x8xf32>
    %50 = vector.extract_strided_slice %31 {offsets = [0, 72], sizes = [8, 8], strides = [1, 1]} : vector<8x96xf32> to vector<8x8xf32>
    %cst_19 = arith.constant dense<0.000000e+00> : vector<8x8xf32>
    %51 = tpu.matmul %48, %49, %cst_19 {dimension_numbers = #tpu.dot_dimension_numbers<[1], [1], [0], [0], [0, 0, 1, 0], [], []>} : vector<8x8xf32>, vector<8x8xf32>, vector<8x8xf32> -> vector<8x8xf32>
    %cst_20 = arith.constant dense<0xFF800000> : vector<8xf32>
    %52 = vector.multi_reduction <maximumf>, %51, %cst_20 [1] : vector<8x8xf32> to vector<8xf32>
    %53 = vector.shape_cast %52 : vector<8xf32> to vector<8x1xf32>
    %54 = vector.broadcast %53 : vector<8x1xf32> to vector<8x8xf32>
    %55 = arith.subf %51, %54 : vector<8x8xf32>
    %56 = math.exp %55 : vector<8x8xf32>
    %cst_21 = arith.constant dense<0.000000e+00> : vector<8xf32>
    %57 = vector.multi_reduction <add>, %56, %cst_21 [1] : vector<8x8xf32> to vector<8xf32>
    %58 = vector.shape_cast %57 : vector<8xf32> to vector<8x1xf32>
    %59 = tpu.reciprocal %58 {approx = true} : vector<8x1xf32> -> vector<8x1xf32>
    %60 = vector.broadcast %59 : vector<8x1xf32> to vector<8x8xf32>
    %61 = arith.mulf %56, %60 : vector<8x8xf32>
    %cst_22 = arith.constant dense<0.000000e+00> : vector<8x8xf32>
    %62 = tpu.matmul %61, %50, %cst_22 {dimension_numbers = #tpu.dot_dimension_numbers<[1], [0], [0], [1], [0, 0, 1, 1], [], []>} : vector<8x8xf32>, vector<8x8xf32>, vector<8x8xf32> -> vector<8x8xf32>
    %c0_23 = arith.constant 0 : index
    %c8 = arith.constant 8 : index
    %63 = vector.load %arg14[%c0_23, %c8] : memref<8x32xf32, #tpu.memory_space<vmem>>, vector<8x8xf32>
    tpu.vector_store %arg14[%c0_23, %c8], %62 {strides = array<i32>} : memref<8x32xf32, #tpu.memory_space<vmem>>, vector<8x8xf32>,
    %64 = vector.extract_strided_slice %31 {offsets = [0, 16], sizes = [8, 8], strides = [1, 1]} : vector<8x96xf32> to vector<8x8xf32>
    %65 = vector.extract_strided_slice %31 {offsets = [0, 48], sizes = [8, 8], strides = [1, 1]} : vector<8x96xf32> to vector<8x8xf32>
    %66 = vector.extract_strided_slice %31 {offsets = [0, 80], sizes = [8, 8], strides = [1, 1]} : vector<8x96xf32> to vector<8x8xf32>
    %cst_24 = arith.constant dense<0.000000e+00> : vector<8x8xf32>
    %67 = tpu.matmul %64, %65, %cst_24 {dimension_numbers = #tpu.dot_dimension_numbers<[1], [1], [0], [0], [0, 0, 1, 0], [], []>} : vector<8x8xf32>, vector<8x8xf32>, vector<8x8xf32> -> vector<8x8xf32>
    %cst_25 = arith.constant dense<0xFF800000> : vector<8xf32>
    %68 = vector.multi_reduction <maximumf>, %67, %cst_25 [1] : vector<8x8xf32> to vector<8xf32>
    %69 = vector.shape_cast %68 : vector<8xf32> to vector<8x1xf32>
    %70 = vector.broadcast %69 : vector<8x1xf32> to vector<8x8xf32>
    %71 = arith.subf %67, %70 : vector<8x8xf32>
    %72 = math.exp %71 : vector<8x8xf32>
    %cst_26 = arith.constant dense<0.000000e+00> : vector<8xf32>
    %73 = vector.multi_reduction <add>, %72, %cst_26 [1] : vector<8x8xf32> to vector<8xf32>
    %74 = vector.shape_cast %73 : vector<8xf32> to vector<8x1xf32>
    %75 = tpu.reciprocal %74 {approx = true} : vector<8x1xf32> -> vector<8x1xf32>
    %76 = vector.broadcast %75 : vector<8x1xf32> to vector<8x8xf32>
    %77 = arith.mulf %72, %76 : vector<8x8xf32>
    %cst_27 = arith.constant dense<0.000000e+00> : vector<8x8xf32>
    %78 = tpu.matmul %77, %66, %cst_27 {dimension_numbers = #tpu.dot_dimension_numbers<[1], [0], [0], [1], [0, 0, 1, 1], [], []>} : vector<8x8xf32>, vector<8x8xf32>, vector<8x8xf32> -> vector<8x8xf32>
    %c0_28 = arith.constant 0 : index
    %c16 = arith.constant 16 : index
    %79 = vector.load %arg14[%c0_28, %c16] : memref<8x32xf32, #tpu.memory_space<vmem>>, vector<8x8xf32>
    tpu.vector_store %arg14[%c0_28, %c16], %78 {strides = array<i32>} : memref<8x32xf32, #tpu.memory_space<vmem>>, vector<8x8xf32>,
    %80 = vector.extract_strided_slice %31 {offsets = [0, 24], sizes = [8, 8], strides = [1, 1]} : vector<8x96xf32> to vector<8x8xf32>
    %81 = vector.extract_strided_slice %31 {offsets = [0, 56], sizes = [8, 8], strides = [1, 1]} : vector<8x96xf32> to vector<8x8xf32>
    %82 = vector.extract_strided_slice %31 {offsets = [0, 88], sizes = [8, 8], strides = [1, 1]} : vector<8x96xf32> to vector<8x8xf32>
    %cst_29 = arith.constant dense<0.000000e+00> : vector<8x8xf32>
    %83 = tpu.matmul %80, %81, %cst_29 {dimension_numbers = #tpu.dot_dimension_numbers<[1], [1], [0], [0], [0, 0, 1, 0], [], []>} : vector<8x8xf32>, vector<8x8xf32>, vector<8x8xf32> -> vector<8x8xf32>
    %cst_30 = arith.constant dense<0xFF800000> : vector<8xf32>
    %84 = vector.multi_reduction <maximumf>, %83, %cst_30 [1] : vector<8x8xf32> to vector<8xf32>
    %85 = vector.shape_cast %84 : vector<8xf32> to vector<8x1xf32>
    %86 = vector.broadcast %85 : vector<8x1xf32> to vector<8x8xf32>
    %87 = arith.subf %83, %86 : vector<8x8xf32>
    %88 = math.exp %87 : vector<8x8xf32>
    %cst_31 = arith.constant dense<0.000000e+00> : vector<8xf32>
    %89 = vector.multi_reduction <add>, %88, %cst_31 [1] : vector<8x8xf32> to vector<8xf32>
    %90 = vector.shape_cast %89 : vector<8xf32> to vector<8x1xf32>
    %91 = tpu.reciprocal %90 {approx = true} : vector<8x1xf32> -> vector<8x1xf32>
    %92 = vector.broadcast %91 : vector<8x1xf32> to vector<8x8xf32>
    %93 = arith.mulf %88, %92 : vector<8x8xf32>
    %cst_32 = arith.constant dense<0.000000e+00> : vector<8x8xf32>
    %94 = tpu.matmul %93, %82, %cst_32 {dimension_numbers = #tpu.dot_dimension_numbers<[1], [0], [0], [1], [0, 0, 1, 1], [], []>} : vector<8x8xf32>, vector<8x8xf32>, vector<8x8xf32> -> vector<8x8xf32>
    %c0_33 = arith.constant 0 : index
    %c24 = arith.constant 24 : index
    %95 = vector.load %arg14[%c0_33, %c24] : memref<8x32xf32, #tpu.memory_space<vmem>>, vector<8x8xf32>
    tpu.vector_store %arg14[%c0_33, %c24], %94 {strides = array<i32>} : memref<8x32xf32, #tpu.memory_space<vmem>>, vector<8x8xf32>,
    %c0_34 = arith.constant 0 : index
    %c0_35 = arith.constant 0 : index
    %96 = vector.load %arg14[%c0_34, %c0_35] : memref<8x32xf32, #tpu.memory_space<vmem>>, vector<8x32xf32>
    %c0_36 = arith.constant 0 : index
    %c0_37 = arith.constant 0 : index
    %97 = vector.load %arg5[%c0_36, %c0_37] : memref<32x32xf32, #tpu.memory_space<vmem>>, vector<32x32xf32>
    %cst_38 = arith.constant dense<0.000000e+00> : vector<8x32xf32>
    %98 = tpu.matmul %96, %97, %cst_38 {dimension_numbers = #tpu.dot_dimension_numbers<[1], [0], [0], [1], [0, 0, 1, 1], [], []>} : vector<8x32xf32>, vector<32x32xf32>, vector<8x32xf32> -> vector<8x32xf32>
    %c0_39 = arith.constant 0 : index
    %c0_40 = arith.constant 0 : index
    %99 = vector.load %arg6[%c0_39, %c0_40] : memref<1x32xf32, #tpu.memory_space<vmem>>, vector<1x32xf32>
    %100 = vector.shape_cast %99 : vector<1x32xf32> to vector<32xf32>
    %101 = vector.shape_cast %100 : vector<32xf32> to vector<1x32xf32>
    %102 = vector.broadcast %101 : vector<1x32xf32> to vector<8x32xf32>
    %103 = arith.addf %98, %102 : vector<8x32xf32>
    %104 = arith.addf %1, %103 : vector<8x32xf32>
    %c0_41 = arith.constant 0 : index
    %c0_42 = arith.constant 0 : index
    %105 = vector.load %arg7[%c0_41, %c0_42] : memref<1x32xf32, #tpu.memory_space<vmem>>, vector<1x32xf32>
    %106 = vector.shape_cast %105 : vector<1x32xf32> to vector<32xf32>
    %c0_43 = arith.constant 0 : index
    %c0_44 = arith.constant 0 : index
    %107 = vector.load %arg8[%c0_43, %c0_44] : memref<1x32xf32, #tpu.memory_space<vmem>>, vector<1x32xf32>
    %108 = vector.shape_cast %107 : vector<1x32xf32> to vector<32xf32>
    %cst_45 = arith.constant dense<0.000000e+00> : vector<8xf32>
    %109 = vector.multi_reduction <add>, %104, %cst_45 [1] : vector<8x32xf32> to vector<8xf32>
    %110 = vector.shape_cast %109 : vector<8xf32> to vector<8x1xf32>
    %cst_46 = arith.constant 3.200000e+01 : f32
    %111 = vector.broadcast %cst_46 : f32 to vector<8x1xf32>
    %112 = arith.divf %110, %111 : vector<8x1xf32>
    %113 = vector.broadcast %112 : vector<8x1xf32> to vector<8x32xf32>
    %114 = arith.subf %104, %113 : vector<8x32xf32>
    %115 = arith.mulf %114, %114 : vector<8x32xf32>
    %cst_47 = arith.constant dense<0.000000e+00> : vector<8xf32>
    %116 = vector.multi_reduction <add>, %115, %cst_47 [1] : vector<8x32xf32> to vector<8xf32>
    %117 = vector.shape_cast %116 : vector<8xf32> to vector<8x1xf32>
    %cst_48 = arith.constant 3.200000e+01 : f32
    %118 = vector.broadcast %cst_48 : f32 to vector<8x1xf32>
    %119 = arith.divf %117, %118 : vector<8x1xf32>
    %120 = vector.broadcast %112 : vector<8x1xf32> to vector<8x32xf32>
    %121 = arith.subf %104, %120 : vector<8x32xf32>
    %cst_49 = arith.constant 9.99999974E-6 : f32
    %122 = vector.broadcast %cst_49 : f32 to vector<8x1xf32>
    %123 = arith.addf %119, %122 : vector<8x1xf32>
    %124 = math.rsqrt %123 : vector<8x1xf32>
    %125 = vector.broadcast %124 : vector<8x1xf32> to vector<8x32xf32>
    %126 = arith.mulf %121, %125 : vector<8x32xf32>
    %127 = vector.shape_cast %106 : vector<32xf32> to vector<1x32xf32>
    %128 = vector.broadcast %127 : vector<1x32xf32> to vector<8x32xf32>
    %129 = arith.mulf %126, %128 : vector<8x32xf32>
    %130 = vector.shape_cast %108 : vector<32xf32> to vector<1x32xf32>
    %131 = vector.broadcast %130 : vector<1x32xf32> to vector<8x32xf32>
    %132 = arith.addf %129, %131 : vector<8x32xf32>
    %c0_50 = arith.constant 0 : index
    %c0_51 = arith.constant 0 : index
    %133 = vector.load %arg9[%c0_50, %c0_51] : memref<32x128xf32, #tpu.memory_space<vmem>>, vector<32x128xf32>
    %cst_52 = arith.constant dense<0.000000e+00> : vector<8x128xf32>
    %134 = tpu.matmul %132, %133, %cst_52 {dimension_numbers = #tpu.dot_dimension_numbers<[1], [0], [0], [1], [0, 0, 1, 1], [], []>} : vector<8x32xf32>, vector<32x128xf32>, vector<8x128xf32> -> vector<8x128xf32>
    %c0_53 = arith.constant 0 : index
    %c0_54 = arith.constant 0 : index
    %135 = vector.load %arg10[%c0_53, %c0_54] : memref<1x128xf32, #tpu.memory_space<vmem>>, vector<1x128xf32>
    %136 = vector.shape_cast %135 : vector<1x128xf32> to vector<128xf32>
    %137 = vector.shape_cast %136 : vector<128xf32> to vector<1x128xf32>
    %138 = vector.broadcast %137 : vector<1x128xf32> to vector<8x128xf32>
    %139 = arith.addf %134, %138 : vector<8x128xf32>
    %cst_55 = arith.constant 5.000000e-01 : f32
    %140 = vector.broadcast %cst_55 : f32 to vector<8x128xf32>
    %141 = arith.mulf %140, %139 : vector<8x128xf32>
    %cst_56 = arith.constant 0.707106769 : f32
    %142 = vector.broadcast %cst_56 : f32 to vector<8x128xf32>
    %143 = arith.mulf %139, %142 : vector<8x128xf32>
    %cst_57 = arith.constant 0.000000e+00 : f32
    %144 = vector.broadcast %cst_57 : f32 to vector<8x128xf32>
    %145 = arith.cmpf olt, %143, %144 : vector<8x128xf32>
    %cst_58 = arith.constant -1.000000e+00 : f32
    %cst_59 = arith.constant 1.000000e+00 : f32
    %146 = vector.broadcast %cst_58 : f32 to vector<8x128xf32>
    %147 = vector.broadcast %cst_59 : f32 to vector<8x128xf32>
    %148 = arith.select %145, %146, %147 : vector<8x128xi1>, vector<8x128xf32>
    %149 = math.absf %143 : vector<8x128xf32>
    %cst_60 = arith.constant 0.327591091 : f32
    %150 = vector.broadcast %cst_60 : f32 to vector<8x128xf32>
    %151 = arith.mulf %150, %149 : vector<8x128xf32>
    %cst_61 = arith.constant 1.000000e+00 : f32
    %152 = vector.broadcast %cst_61 : f32 to vector<8x128xf32>
    %153 = arith.addf %152, %151 : vector<8x128xf32>
    %cst_62 = arith.constant 1.000000e+00 : f32
    %154 = vector.broadcast %cst_62 : f32 to vector<8x128xf32>
    %155 = arith.divf %154, %153 : vector<8x128xf32>
    %cst_63 = arith.constant 1.06140542 : f32
    %156 = vector.broadcast %cst_63 : f32 to vector<8x128xf32>
    %157 = arith.mulf %156, %155 : vector<8x128xf32>
    %cst_64 = arith.constant -1.45315206 : f32
    %158 = vector.broadcast %cst_64 : f32 to vector<8x128xf32>
    %159 = arith.addf %157, %158 : vector<8x128xf32>
    %160 = arith.mulf %159, %155 : vector<8x128xf32>
    %cst_65 = arith.constant 1.42141378 : f32
    %161 = vector.broadcast %cst_65 : f32 to vector<8x128xf32>
    %162 = arith.addf %160, %161 : vector<8x128xf32>
    %163 = arith.mulf %162, %155 : vector<8x128xf32>
    %cst_66 = arith.constant -0.284496725 : f32
    %164 = vector.broadcast %cst_66 : f32 to vector<8x128xf32>
    %165 = arith.addf %163, %164 : vector<8x128xf32>
    %166 = arith.mulf %165, %155 : vector<8x128xf32>
    %cst_67 = arith.constant 0.254829586 : f32
    %167 = vector.broadcast %cst_67 : f32 to vector<8x128xf32>
    %168 = arith.addf %166, %167 : vector<8x128xf32>
    %169 = arith.mulf %168, %155 : vector<8x128xf32>
    %170 = arith.mulf %149, %149 : vector<8x128xf32>
    %cst_68 = arith.constant 0.000000e+00 : f32
    %171 = vector.broadcast %cst_68 : f32 to vector<8x128xf32>
    %172 = arith.subf %171, %170 : vector<8x128xf32>
    %173 = math.exp %172 : vector<8x128xf32>
    %174 = arith.mulf %169, %173 : vector<8x128xf32>
    %cst_69 = arith.constant 1.000000e+00 : f32
    %175 = vector.broadcast %cst_69 : f32 to vector<8x128xf32>
    %176 = arith.subf %175, %174 : vector<8x128xf32>
    %177 = arith.mulf %148, %176 : vector<8x128xf32>
    %cst_70 = arith.constant 1.000000e+00 : f32
    %178 = vector.broadcast %cst_70 : f32 to vector<8x128xf32>
    %179 = arith.addf %178, %177 : vector<8x128xf32>
    %180 = arith.mulf %141, %179 : vector<8x128xf32>
    %c0_71 = arith.constant 0 : index
    %c0_72 = arith.constant 0 : index
    %181 = vector.load %arg11[%c0_71, %c0_72] : memref<128x32xf32, #tpu.memory_space<vmem>>, vector<128x32xf32>
    %cst_73 = arith.constant dense<0.000000e+00> : vector<8x32xf32>
    %182 = tpu.matmul %180, %181, %cst_73 {dimension_numbers = #tpu.dot_dimension_numbers<[1], [0], [0], [1], [0, 0, 1, 1], [], []>} : vector<8x128xf32>, vector<128x32xf32>, vector<8x32xf32> -> vector<8x32xf32>
    %c0_74 = arith.constant 0 : index
    %c0_75 = arith.constant 0 : index
    %183 = vector.load %arg12[%c0_74, %c0_75] : memref<1x32xf32, #tpu.memory_space<vmem>>, vector<1x32xf32>
    %184 = vector.shape_cast %183 : vector<1x32xf32> to vector<32xf32>
    %185 = vector.shape_cast %184 : vector<32xf32> to vector<1x32xf32>
    %186 = vector.broadcast %185 : vector<1x32xf32> to vector<8x32xf32>
    %187 = arith.addf %182, %186 : vector<8x32xf32>
    %cst_76 = arith.constant 5.000000e-01 : f32
    %188 = vector.broadcast %cst_76 : f32 to vector<8x32xf32>
    %189 = arith.mulf %188, %187 : vector<8x32xf32>
    %cst_77 = arith.constant 0.707106769 : f32
    %190 = vector.broadcast %cst_77 : f32 to vector<8x32xf32>
    %191 = arith.mulf %187, %190 : vector<8x32xf32>
    %cst_78 = arith.constant 0.000000e+00 : f32
    %192 = vector.broadcast %cst_78 : f32 to vector<8x32xf32>
    %193 = arith.cmpf olt, %191, %192 : vector<8x32xf32>
    %cst_79 = arith.constant -1.000000e+00 : f32
    %cst_80 = arith.constant 1.000000e+00 : f32
    %194 = vector.broadcast %cst_79 : f32 to vector<8x32xf32>
    %195 = vector.broadcast %cst_80 : f32 to vector<8x32xf32>
    %196 = arith.select %193, %194, %195 : vector<8x32xi1>, vector<8x32xf32>
    %197 = math.absf %191 : vector<8x32xf32>
    %cst_81 = arith.constant 0.327591091 : f32
    %198 = vector.broadcast %cst_81 : f32 to vector<8x32xf32>
    %199 = arith.mulf %198, %197 : vector<8x32xf32>
    %cst_82 = arith.constant 1.000000e+00 : f32
    %200 = vector.broadcast %cst_82 : f32 to vector<8x32xf32>
    %201 = arith.addf %200, %199 : vector<8x32xf32>
    %cst_83 = arith.constant 1.000000e+00 : f32
    %202 = vector.broadcast %cst_83 : f32 to vector<8x32xf32>
    %203 = arith.divf %202, %201 : vector<8x32xf32>
    %cst_84 = arith.constant 1.06140542 : f32
    %204 = vector.broadcast %cst_84 : f32 to vector<8x32xf32>
    %205 = arith.mulf %204, %203 : vector<8x32xf32>
    %cst_85 = arith.constant -1.45315206 : f32
    %206 = vector.broadcast %cst_85 : f32 to vector<8x32xf32>
    %207 = arith.addf %205, %206 : vector<8x32xf32>
    %208 = arith.mulf %207, %203 : vector<8x32xf32>
    %cst_86 = arith.constant 1.42141378 : f32
    %209 = vector.broadcast %cst_86 : f32 to vector<8x32xf32>
    %210 = arith.addf %208, %209 : vector<8x32xf32>
    %211 = arith.mulf %210, %203 : vector<8x32xf32>
    %cst_87 = arith.constant -0.284496725 : f32
    %212 = vector.broadcast %cst_87 : f32 to vector<8x32xf32>
    %213 = arith.addf %211, %212 : vector<8x32xf32>
    %214 = arith.mulf %213, %203 : vector<8x32xf32>
    %cst_88 = arith.constant 0.254829586 : f32
    %215 = vector.broadcast %cst_88 : f32 to vector<8x32xf32>
    %216 = arith.addf %214, %215 : vector<8x32xf32>
    %217 = arith.mulf %216, %203 : vector<8x32xf32>
    %218 = arith.mulf %197, %197 : vector<8x32xf32>
    %cst_89 = arith.constant 0.000000e+00 : f32
    %219 = vector.broadcast %cst_89 : f32 to vector<8x32xf32>
    %220 = arith.subf %219, %218 : vector<8x32xf32>
    %221 = math.exp %220 : vector<8x32xf32>
    %222 = arith.mulf %217, %221 : vector<8x32xf32>
    %cst_90 = arith.constant 1.000000e+00 : f32
    %223 = vector.broadcast %cst_90 : f32 to vector<8x32xf32>
    %224 = arith.subf %223, %222 : vector<8x32xf32>
    %225 = arith.mulf %196, %224 : vector<8x32xf32>
    %cst_91 = arith.constant 1.000000e+00 : f32
    %226 = vector.broadcast %cst_91 : f32 to vector<8x32xf32>
    %227 = arith.addf %226, %225 : vector<8x32xf32>
    %228 = arith.mulf %189, %227 : vector<8x32xf32>
    %229 = arith.addf %104, %228 : vector<8x32xf32>
    %c0_92 = arith.constant 0 : index
    %c0_93 = arith.constant 0 : index
    %c0_94 = arith.constant 0 : index
    %230 = vector.load %arg13[%c0_92, %c0_93, %c0_94] : memref<1x8x32xf32, #tpu.memory_space<vmem>>, vector<1x8x32xf32>
    %231 = vector.shape_cast %230 : vector<1x8x32xf32> to vector<8x32xf32>
    %232 = vector.shape_cast %229 : vector<8x32xf32> to vector<1x8x32xf32>
    tpu.vector_store %arg13[%c0_92, %c0_93, %c0_94], %232 {strides = array<i32>} : memref<1x8x32xf32, #tpu.memory_space<vmem>>, vector<1x8x32xf32>,
    return
  }
  func.func @transform_0(%arg0: i32) -> (i32, i32, i32) {
    %c0_i32 = arith.constant 0 : i32
    %c0_i32_0 = arith.constant 0 : i32
    %c0_i32_1 = arith.constant 0 : i32
    return %arg0, %c0_i32, %c0_i32_0 : i32, i32, i32
  }
  func.func @transform_1(%arg0: i32) -> (i32, i32) {
    %c0_i32 = arith.constant 0 : i32
    %c0_i32_0 = arith.constant 0 : i32
    %c0_i32_1 = arith.constant 0 : i32
    return %c0_i32, %c0_i32_0 : i32, i32
  }
  func.func @transform_2(%arg0: i32) -> (i32, i32) {
    %c0_i32 = arith.constant 0 : i32
    %c0_i32_0 = arith.constant 0 : i32
    %c0_i32_1 = arith.constant 0 : i32
    return %c0_i32, %c0_i32_0 : i32, i32
  }
  func.func @transform_3(%arg0: i32) -> (i32, i32) {
    %c0_i32 = arith.constant 0 : i32
    %c0_i32_0 = arith.constant 0 : i32
    %c0_i32_1 = arith.constant 0 : i32
    return %c0_i32, %c0_i32_0 : i32, i32
  }
  func.func @transform_4(%arg0: i32) -> (i32, i32) {
    %c0_i32 = arith.constant 0 : i32
    %c0_i32_0 = arith.constant 0 : i32
    %c0_i32_1 = arith.constant 0 : i32
    return %c0_i32, %c0_i32_0 : i32, i32
  }
  func.func @transform_5(%arg0: i32) -> (i32, i32) {
    %c0_i32 = arith.constant 0 : i32
    %c0_i32_0 = arith.constant 0 : i32
    %c0_i32_1 = arith.constant 0 : i32
    return %c0_i32, %c0_i32_0 : i32, i32
  }
  func.func @transform_6(%arg0: i32) -> (i32, i32) {
    %c0_i32 = arith.constant 0 : i32
    %c0_i32_0 = arith.constant 0 : i32
    %c0_i32_1 = arith.constant 0 : i32
    return %c0_i32, %c0_i32_0 : i32, i32
  }
  func.func @transform_7(%arg0: i32) -> (i32, i32) {
    %c0_i32 = arith.constant 0 : i32
    %c0_i32_0 = arith.constant 0 : i32
    %c0_i32_1 = arith.constant 0 : i32
    return %c0_i32, %c0_i32_0 : i32, i32
  }
  func.func @transform_8(%arg0: i32) -> (i32, i32) {
    %c0_i32 = arith.constant 0 : i32
    %c0_i32_0 = arith.constant 0 : i32
    %c0_i32_1 = arith.constant 0 : i32
    return %c0_i32, %c0_i32_0 : i32, i32
  }
  func.func @transform_9(%arg0: i32) -> (i32, i32) {
    %c0_i32 = arith.constant 0 : i32
    %c0_i32_0 = arith.constant 0 : i32
    %c0_i32_1 = arith.constant 0 : i32
    return %c0_i32, %c0_i32_0 : i32, i32
  }
  func.func @transform_10(%arg0: i32) -> (i32, i32) {
    %c0_i32 = arith.constant 0 : i32
    %c0_i32_0 = arith.constant 0 : i32
    %c0_i32_1 = arith.constant 0 : i32
    return %c0_i32, %c0_i32_0 : i32, i32
  }
  func.func @transform_11(%arg0: i32) -> (i32, i32) {
    %c0_i32 = arith.constant 0 : i32
    %c0_i32_0 = arith.constant 0 : i32
    %c0_i32_1 = arith.constant 0 : i32
    return %c0_i32, %c0_i32_0 : i32, i32
  }
  func.func @transform_12(%arg0: i32) -> (i32, i32, i32) {
    %c0_i32 = arith.constant 0 : i32
    %c0_i32_0 = arith.constant 0 : i32
    %c0_i32_1 = arith.constant 0 : i32
    return %arg0, %c0_i32, %c0_i32_0 : i32, i32, i32
  }
}

</mosaic_0001>

<llo_original>
// kernel: tpu_custom_call.1
$region0: #{tpu_custom_call.1}
  #allocation0 [shape = 'u32[]', space=smem, size = 0x4, offset = 0x4, fixed_abs, tag = 'smem constant byte address 0x4 - core index']
  #allocation1 [shape = 'u32[144,128]{1,0:T(1,128)}', space=vmem, size = 0x12000, scoped, tag = 'internal scratch']
  #allocation2 [shape = 'f32[8,32]{1,0:T(8,128)}', space=vmem, size = 0x1000, scoped, tag = 'scratch operand']
  %s0 = inlined_call_operand.vmem [shape: f32[2,8,32], index: 0, kind: input, shape index: {}]
  %s1 = inlined_call_operand.vmem [shape: f32[1,32], index: 1, kind: input, shape index: {}]
  %s2 = inlined_call_operand.vmem [shape: f32[1,32], index: 2, kind: input, shape index: {}]
  %s3 = inlined_call_operand.vmem [shape: f32[32,96], index: 3, kind: input, shape index: {}]
  %s4 = inlined_call_operand.vmem [shape: f32[32,32], index: 4, kind: input, shape index: {}]
  %s5 = inlined_call_operand.vmem [shape: f32[1,32], index: 5, kind: input, shape index: {}]
  %s6 = inlined_call_operand.vmem [shape: f32[1,32], index: 6, kind: input, shape index: {}]
  %s7 = inlined_call_operand.vmem [shape: f32[1,32], index: 7, kind: input, shape index: {}]
  %s8 = inlined_call_operand.vmem [shape: f32[32,128], index: 8, kind: input, shape index: {}]
  %s9 = inlined_call_operand.vmem [shape: f32[1,128], index: 9, kind: input, shape index: {}]
  %s10 = inlined_call_operand.vmem [shape: f32[128,32], index: 10, kind: input, shape index: {}]
  %s11 = inlined_call_operand.vmem [shape: f32[1,32], index: 11, kind: input, shape index: {}]
  %s12 = inlined_call_operand.hbm [shape: f32[2,8,32], index: 12, kind: output, shape index: {}]
  %s13 = sld [smem:[#allocation0]]
  $region81: #{tpu_custom_call.1} parent=0
    _
  %s15 = ssub.s32 1, %s13
  %s16 = scalar_select 0, %s15, %s13
  $region1: #{tpu_custom_call.1} parent=0
    #allocation3 [shape = 'u8[8192]{0}', space=vmem, size = 0x2000, scoped, tag = 'output window, operand 0']
    #allocation4 [shape = 's32[2]{0}', space=sflag, size = 0x8, scoped, tag = 'scoped memory for tpu_custom_call.1']
    %17 = vsyncpa [#allocation4], 0
    %s18 = scalar_lea.sflag [#allocation4], 1
    %19 = vsyncpa %s18, 0
    loop: start=0, step=1, limit=4
    $region2: #{tpu_custom_call.1} parent=1 // loop_pre_header
      _
    $region3: #{tpu_custom_call.1} parent=1 // loop_header
      %s21 = sphi 0, %s25
      %p22 = scmp.ge.s32.totalorder %s21, 4
      %s31 = sphi 0, %s33
      %s34 = sphi 0, %s31
      %s35 = sphi 0, %s34
      %s51 = sphi 0, %s35
      %s55 = sphi 0, %s55
      %s57 = sphi 0, %s55
      %s58 = sphi 0, %s57
      %s72 = sphi 0, %s58
      %s76 = sphi 0, %s76
      %s78 = sphi 0, %s76
      %s79 = sphi 0, %s78
      %s93 = sphi 0, %s79
      %s97 = sphi 0, %s97
      %s99 = sphi 0, %s97
      %s100 = sphi 0, %s99
      %s114 = sphi 0, %s100
      %s118 = sphi 0, %s118
      %s120 = sphi 0, %s118
      %s121 = sphi 0, %s120
      %s135 = sphi 0, %s121
      %s139 = sphi 0, %s139
      %s141 = sphi 0, %s139
      %s142 = sphi 0, %s141
      %s156 = sphi 0, %s142
      %s160 = sphi 0, %s160
      %s162 = sphi 0, %s160
      %s163 = sphi 0, %s162
      %s177 = sphi 0, %s163
      %s181 = sphi 0, %s181
      %s183 = sphi 0, %s181
      %s184 = sphi 0, %s183
      %s198 = sphi 0, %s184
      %s202 = sphi 0, %s202
      %s204 = sphi 0, %s202
      %s205 = sphi 0, %s204
      %s219 = sphi 0, %s205
      %s223 = sphi 0, %s223
      %s225 = sphi 0, %s223
      %s226 = sphi 0, %s225
      %s240 = sphi 0, %s226
      %s244 = sphi 0, %s244
      %s246 = sphi 0, %s244
      %s247 = sphi 0, %s246
      %s261 = sphi 0, %s247
      %s265 = sphi 0, %s265
      %s267 = sphi 0, %s265
      %s268 = sphi 0, %s267
      %s282 = sphi 0, %s268
      %s288 = sphi 0, %s290
      %s291 = sphi 0, %s288
      %s292 = sphi 0, %s291
      %s308 = sphi 0, %s292
    $region4: #{tpu_custom_call.1} parent=1 // loop_header_branch
      %24 = sbr.rel (%p22) target = $region8
    $region5: #{tpu_custom_call.1} parent=1 // loop_body
      %s26 = ssub.s32 %s21, 1
      %s27 = ssub.s32 %s21, 2
      %s28 = sadd.s32 %s21, 1
      %s29 = ssub.s32 %s21, %s28
      %p30 = scmp.eq.s32.totalorder %s29, 0
      %s32 = sadd.s32 %s31, 1
      %s33 = scalar_select %p30, %s31, %s32
      %p36 = pneg %p30
      %p37 = scmp.eq.s32.totalorder %s21, 1
      %p38 = por %p36, %p37
      %p39 = scmp.ne.s32.totalorder %s31, %s34
      %p40 = scmp.eq.s32.totalorder %s21, 0
      %p41 = por %p39, %p40
      %p42 = scmp.ne.s32.totalorder %s31, %s34
      %p43 = scmp.eq.s32.totalorder %s26, 1
      %p44 = por %p42, %p43
      %p45 = scmp.ne.s32.totalorder %s34, %s35
      %p46 = scmp.eq.s32.totalorder %s26, 0
      %p47 = por %p45, %p46
      %p48 = scmp.ne.s32.totalorder %s34, %s35
      %p49 = scmp.eq.s32.totalorder %s27, 1
      %p50 = por %p48, %p49
      %p52 = scmp.ne.s32.totalorder %s35, %s51
      %p53 = scmp.eq.s32.totalorder %s27, 0
      %p54 = por %p52, %p53
      %s56 = sadd.s32 %s55, 1
      %p59 = scmp.eq.s32.totalorder %s21, 1
      %p60 = scmp.ne.s32.totalorder %s55, %s57
      %p61 = scmp.eq.s32.totalorder %s21, 0
      %p62 = por %p60, %p61
      %p63 = scmp.ne.s32.totalorder %s55, %s57
      %p64 = scmp.eq.s32.totalorder %s26, 1
      %p65 = por %p63, %p64
      %p66 = scmp.ne.s32.totalorder %s57, %s58
      %p67 = scmp.eq.s32.totalorder %s26, 0
      %p68 = por %p66, %p67
      %p69 = scmp.ne.s32.totalorder %s57, %s58
      %p70 = scmp.eq.s32.totalorder %s27, 1
      %p71 = por %p69, %p70
      %p73 = scmp.ne.s32.totalorder %s58, %s72
      %p74 = scmp.eq.s32.totalorder %s27, 0
      %p75 = por %p73, %p74
      %s77 = sadd.s32 %s76, 1
      %p80 = scmp.eq.s32.totalorder %s21, 1
      %p81 = scmp.ne.s32.totalorder %s76, %s78
      %p82 = scmp.eq.s32.totalorder %s21, 0
      %p83 = por %p81, %p82
      %p84 = scmp.ne.s32.totalorder %s76, %s78
      %p85 = scmp.eq.s32.totalorder %s26, 1
      %p86 = por %p84, %p85
      %p87 = scmp.ne.s32.totalorder %s78, %s79
      %p88 = scmp.eq.s32.totalorder %s26, 0
      %p89 = por %p87, %p88
      %p90 = scmp.ne.s32.totalorder %s78, %s79
      %p91 = scmp.eq.s32.totalorder %s27, 1
      %p92 = por %p90, %p91
      %p94 = scmp.ne.s32.totalorder %s79, %s93
      %p95 = scmp.eq.s32.totalorder %s27, 0
      %p96 = por %p94, %p95
      %s98 = sadd.s32 %s97, 1
      %p101 = scmp.eq.s32.totalorder %s21, 1
      %p102 = scmp.ne.s32.totalorder %s97, %s99
      %p103 = scmp.eq.s32.totalorder %s21, 0
      %p104 = por %p102, %p103
      %p105 = scmp.ne.s32.totalorder %s97, %s99
      %p106 = scmp.eq.s32.totalorder %s26, 1
      %p107 = por %p105, %p106
      %p108 = scmp.ne.s32.totalorder %s99, %s100
      %p109 = scmp.eq.s32.totalorder %s26, 0
      %p110 = por %p108, %p109
      %p111 = scmp.ne.s32.totalorder %s99, %s100
      %p112 = scmp.eq.s32.totalorder %s27, 1
      %p113 = por %p111, %p112
      %p115 = scmp.ne.s32.totalorder %s100, %s114
      %p116 = scmp.eq.s32.totalorder %s27, 0
      %p117 = por %p115, %p116
      %s119 = sadd.s32 %s118, 1
      %p122 = scmp.eq.s32.totalorder %s21, 1
      %p123 = scmp.ne.s32.totalorder %s118, %s120
      %p124 = scmp.eq.s32.totalorder %s21, 0
      %p125 = por %p123, %p124
      %p126 = scmp.ne.s32.totalorder %s118, %s120
      %p127 = scmp.eq.s32.totalorder %s26, 1
      %p128 = por %p126, %p127
      %p129 = scmp.ne.s32.totalorder %s120, %s121
      %p130 = scmp.eq.s32.totalorder %s26, 0
      %p131 = por %p129, %p130
      %p132 = scmp.ne.s32.totalorder %s120, %s121
      %p133 = scmp.eq.s32.totalorder %s27, 1
      %p134 = por %p132, %p133
      %p136 = scmp.ne.s32.totalorder %s121, %s135
      %p137 = scmp.eq.s32.totalorder %s27, 0
      %p138 = por %p136, %p137
      %s140 = sadd.s32 %s139, 1
      %p143 = scmp.eq.s32.totalorder %s21, 1
      %p144 = scmp.ne.s32.totalorder %s139, %s141
      %p145 = scmp.eq.s32.totalorder %s21, 0
      %p146 = por %p144, %p145
      %p147 = scmp.ne.s32.totalorder %s139, %s141
      %p148 = scmp.eq.s32.totalorder %s26, 1
      %p149 = por %p147, %p148
      %p150 = scmp.ne.s32.totalorder %s141, %s142
      %p151 = scmp.eq.s32.totalorder %s26, 0
      %p152 = por %p150, %p151
      %p153 = scmp.ne.s32.totalorder %s141, %s142
      %p154 = scmp.eq.s32.totalorder %s27, 1
      %p155 = por %p153, %p154
      %p157 = scmp.ne.s32.totalorder %s142, %s156
      %p158 = scmp.eq.s32.totalorder %s27, 0
      %p159 = por %p157, %p158
      %s161 = sadd.s32 %s160, 1
      %p164 = scmp.eq.s32.totalorder %s21, 1
      %p165 = scmp.ne.s32.totalorder %s160, %s162
      %p166 = scmp.eq.s32.totalorder %s21, 0
      %p167 = por %p165, %p166
      %p168 = scmp.ne.s32.totalorder %s160, %s162
      %p169 = scmp.eq.s32.totalorder %s26, 1
      %p170 = por %p168, %p169
      %p171 = scmp.ne.s32.totalorder %s162, %s163
      %p172 = scmp.eq.s32.totalorder %s26, 0
      %p173 = por %p171, %p172
      %p174 = scmp.ne.s32.totalorder %s162, %s163
      %p175 = scmp.eq.s32.totalorder %s27, 1
      %p176 = por %p174, %p175
      %p178 = scmp.ne.s32.totalorder %s163, %s177
      %p179 = scmp.eq.s32.totalorder %s27, 0
      %p180 = por %p178, %p179
      %s182 = sadd.s32 %s181, 1
      %p185 = scmp.eq.s32.totalorder %s21, 1
      %p186 = scmp.ne.s32.totalorder %s181, %s183
      %p187 = scmp.eq.s32.totalorder %s21, 0
      %p188 = por %p186, %p187
      %p189 = scmp.ne.s32.totalorder %s181, %s183
      %p190 = scmp.eq.s32.totalorder %s26, 1
      %p191 = por %p189, %p190
      %p192 = scmp.ne.s32.totalorder %s183, %s184
      %p193 = scmp.eq.s32.totalorder %s26, 0
      %p194 = por %p192, %p193
      %p195 = scmp.ne.s32.totalorder %s183, %s184
      %p196 = scmp.eq.s32.totalorder %s27, 1
      %p197 = por %p195, %p196
      %p199 = scmp.ne.s32.totalorder %s184, %s198
      %p200 = scmp.eq.s32.totalorder %s27, 0
      %p201 = por %p199, %p200
      %s203 = sadd.s32 %s202, 1
      %p206 = scmp.eq.s32.totalorder %s21, 1
      %p207 = scmp.ne.s32.totalorder %s202, %s204
      %p208 = scmp.eq.s32.totalorder %s21, 0
      %p209 = por %p207, %p208
      %p210 = scmp.ne.s32.totalorder %s202, %s204
      %p211 = scmp.eq.s32.totalorder %s26, 1
      %p212 = por %p210, %p211
      %p213 = scmp.ne.s32.totalorder %s204, %s205
      %p214 = scmp.eq.s32.totalorder %s26, 0
      %p215 = por %p213, %p214
      %p216 = scmp.ne.s32.totalorder %s204, %s205
      %p217 = scmp.eq.s32.totalorder %s27, 1
      %p218 = por %p216, %p217
      %p220 = scmp.ne.s32.totalorder %s205, %s219
      %p221 = scmp.eq.s32.totalorder %s27, 0
      %p222 = por %p220, %p221
      %s224 = sadd.s32 %s223, 1
      %p227 = scmp.eq.s32.totalorder %s21, 1
      %p228 = scmp.ne.s32.totalorder %s223, %s225
      %p229 = scmp.eq.s32.totalorder %s21, 0
      %p230 = por %p228, %p229
      %p231 = scmp.ne.s32.totalorder %s223, %s225
      %p232 = scmp.eq.s32.totalorder %s26, 1
      %p233 = por %p231, %p232
      %p234 = scmp.ne.s32.totalorder %s225, %s226
      %p235 = scmp.eq.s32.totalorder %s26, 0
      %p236 = por %p234, %p235
      %p237 = scmp.ne.s32.totalorder %s225, %s226
      %p238 = scmp.eq.s32.totalorder %s27, 1
      %p239 = por %p237, %p238
      %p241 = scmp.ne.s32.totalorder %s226, %s240
      %p242 = scmp.eq.s32.totalorder %s27, 0
      %p243 = por %p241, %p242
      %s245 = sadd.s32 %s244, 1
      %p248 = scmp.eq.s32.totalorder %s21, 1
      %p249 = scmp.ne.s32.totalorder %s244, %s246
      %p250 = scmp.eq.s32.totalorder %s21, 0
      %p251 = por %p249, %p250
      %p252 = scmp.ne.s32.totalorder %s244, %s246
      %p253 = scmp.eq.s32.totalorder %s26, 1
      %p254 = por %p252, %p253
      %p255 = scmp.ne.s32.totalorder %s246, %s247
      %p256 = scmp.eq.s32.totalorder %s26, 0
      %p257 = por %p255, %p256
      %p258 = scmp.ne.s32.totalorder %s246, %s247
      %p259 = scmp.eq.s32.totalorder %s27, 1
      %p260 = por %p258, %p259
      %p262 = scmp.ne.s32.totalorder %s247, %s261
      %p263 = scmp.eq.s32.totalorder %s27, 0
      %p264 = por %p262, %p263
      %s266 = sadd.s32 %s265, 1
      %p269 = scmp.eq.s32.totalorder %s21, 1
      %p270 = scmp.ne.s32.totalorder %s265, %s267
      %p271 = scmp.eq.s32.totalorder %s21, 0
      %p272 = por %p270, %p271
      %p273 = scmp.ne.s32.totalorder %s265, %s267
      %p274 = scmp.eq.s32.totalorder %s26, 1
      %p275 = por %p273, %p274
      %p276 = scmp.ne.s32.totalorder %s267, %s268
      %p277 = scmp.eq.s32.totalorder %s26, 0
      %p278 = por %p276, %p277
      %p279 = scmp.ne.s32.totalorder %s267, %s268
      %p280 = scmp.eq.s32.totalorder %s27, 1
      %p281 = por %p279, %p280
      %p283 = scmp.ne.s32.totalorder %s268, %s282
      %p284 = scmp.eq.s32.totalorder %s27, 0
      %p285 = por %p283, %p284
      %s286 = ssub.s32 %s21, %s28
      %p287 = scmp.eq.s32.totalorder %s286, 0
      %s289 = sadd.s32 %s288, 1
      %s290 = scalar_select %p287, %s288, %s289
      %p293 = pneg %p287
      %p294 = scmp.eq.s32.totalorder %s21, 1
      %p295 = por %p293, %p294
      %p296 = scmp.ne.s32.totalorder %s288, %s291
      %p297 = scmp.eq.s32.totalorder %s21, 0
      %p298 = por %p296, %p297
      %p299 = scmp.ne.s32.totalorder %s288, %s291
      %p300 = scmp.eq.s32.totalorder %s26, 1
      %p301 = por %p299, %p300
      %p302 = scmp.ne.s32.totalorder %s291, %s292
      %p303 = scmp.eq.s32.totalorder %s26, 0
      %p304 = por %p302, %p303
      %p305 = scmp.ne.s32.totalorder %s291, %s292
      %p306 = scmp.eq.s32.totalorder %s27, 1
      %p307 = por %p305, %p306
      %p309 = scmp.ne.s32.totalorder %s292, %s308
      %p310 = scmp.eq.s32.totalorder %s27, 0
      %p311 = por %p309, %p310
      %p312 = scmp.le.s32.totalorder 1, %s21
      %p313 = scmp.lt.s32.totalorder %s21, 3
      %p314 = pnand %p312, %p313
      %p315 = pneg %p314
      // Predicated region
      $region9: #{tpu_custom_call.1} parent=5 // pred_check
        _
      $region10: #{tpu_custom_call.1} parent=5 // pred_check_branch
        %317 = sbr.rel (%p314) target = $region12
      $region11: #{tpu_custom_call.1} parent=5 // pred_region
        %s318 = ssub.s32 %s21, 1
        // Predicated region
        $region13: #{tpu_custom_call.1} parent=11 // pred_check
          %p319 = pneg %p68
        $region14: #{tpu_custom_call.1} parent=11 // pred_check_branch
          %321 = sbr.rel (%p319) target = $region16
        $region15: #{tpu_custom_call.1} parent=11 // pred_region
          _
        $region16: #{tpu_custom_call.1} parent=11 // pred_fallthru
          _
        // Predicated region
        $region17: #{tpu_custom_call.1} parent=11 // pred_check
          %p322 = pneg %p89
        $region18: #{tpu_custom_call.1} parent=11 // pred_check_branch
          %324 = sbr.rel (%p322) target = $region20
        $region19: #{tpu_custom_call.1} parent=11 // pred_region
          _
        $region20: #{tpu_custom_call.1} parent=11 // pred_fallthru
          _
        // Predicated region
        $region21: #{tpu_custom_call.1} parent=11 // pred_check
          %p325 = pneg %p110
        $region22: #{tpu_custom_call.1} parent=11 // pred_check_branch
          %327 = sbr.rel (%p325) target = $region24
        $region23: #{tpu_custom_call.1} parent=11 // pred_region
          _
        $region24: #{tpu_custom_call.1} parent=11 // pred_fallthru
          _
        // Predicated region
        $region25: #{tpu_custom_call.1} parent=11 // pred_check
          %p328 = pneg %p131
        $region26: #{tpu_custom_call.1} parent=11 // pred_check_branch
          %330 = sbr.rel (%p328) target = $region28
        $region27: #{tpu_custom_call.1} parent=11 // pred_region
          _
        $region28: #{tpu_custom_call.1} parent=11 // pred_fallthru
          _
        // Predicated region
        $region29: #{tpu_custom_call.1} parent=11 // pred_check
          %p331 = pneg %p152
        $region30: #{tpu_custom_call.1} parent=11 // pred_check_branch
          %333 = sbr.rel (%p331) target = $region32
        $region31: #{tpu_custom_call.1} parent=11 // pred_region
          _
        $region32: #{tpu_custom_call.1} parent=11 // pred_fallthru
          _
        // Predicated region
        $region33: #{tpu_custom_call.1} parent=11 // pred_check
          %p334 = pneg %p173
        $region34: #{tpu_custom_call.1} parent=11 // pred_check_branch
          %336 = sbr.rel (%p334) target = $region36
        $region35: #{tpu_custom_call.1} parent=11 // pred_region
          _
        $region36: #{tpu_custom_call.1} parent=11 // pred_fallthru
          _
        // Predicated region
        $region37: #{tpu_custom_call.1} parent=11 // pred_check
          %p337 = pneg %p194
        $region38: #{tpu_custom_call.1} parent=11 // pred_check_branch
          %339 = sbr.rel (%p337) target = $region40
        $region39: #{tpu_custom_call.1} parent=11 // pred_region
          _
        $region40: #{tpu_custom_call.1} parent=11 // pred_fallthru
          _
        // Predicated region
        $region41: #{tpu_custom_call.1} parent=11 // pred_check
          %p340 = pneg %p215
        $region42: #{tpu_custom_call.1} parent=11 // pred_check_branch
          %342 = sbr.rel (%p340) target = $region44
        $region43: #{tpu_custom_call.1} parent=11 // pred_region
          _
        $region44: #{tpu_custom_call.1} parent=11 // pred_fallthru
          _
        // Predicated region
        $region45: #{tpu_custom_call.1} parent=11 // pred_check
          %p343 = pneg %p236
        $region46: #{tpu_custom_call.1} parent=11 // pred_check_branch
          %345 = sbr.rel (%p343) target = $region48
        $region47: #{tpu_custom_call.1} parent=11 // pred_region
          _
        $region48: #{tpu_custom_call.1} parent=11 // pred_fallthru
          _
        // Predicated region
        $region49: #{tpu_custom_call.1} parent=11 // pred_check
          %p346 = pneg %p257
        $region50: #{tpu_custom_call.1} parent=11 // pred_check_branch
          %348 = sbr.rel (%p346) target = $region52
        $region51: #{tpu_custom_call.1} parent=11 // pred_region
          _
        $region52: #{tpu_custom_call.1} parent=11 // pred_fallthru
          _
        // Predicated region
        $region53: #{tpu_custom_call.1} parent=11 // pred_check
          %p349 = pneg %p278
        $region54: #{tpu_custom_call.1} parent=11 // pred_check_branch
          %351 = sbr.rel (%p349) target = $region56
        $region55: #{tpu_custom_call.1} parent=11 // pred_region
          _
        $region56: #{tpu_custom_call.1} parent=11 // pred_fallthru
          _
      $region12: #{tpu_custom_call.1} parent=5 // pred_fallthru
        _
      %p352 = scmp.lt.s32.totalorder %s21, 2
      // Predicated region
      $region57: #{tpu_custom_call.1} parent=5 // pred_check
        %p353 = pneg %p352
      $region58: #{tpu_custom_call.1} parent=5 // pred_check_branch
        %355 = sbr.rel (%p353) target = $region60
      $region59: #{tpu_custom_call.1} parent=5 // pred_region
        // Predicated region
        $region61: #{tpu_custom_call.1} parent=59 // pred_check
          %p356 = pneg %p41
        $region62: #{tpu_custom_call.1} parent=59 // pred_check_branch
          %358 = sbr.rel (%p356) target = $region64
        $region63: #{tpu_custom_call.1} parent=59 // pred_region
          %p359 = scmp.lt.s32.totalorder %s21, 1
          %s360 = scalar_select %p359, %s21, 1
          %s361 = smul.addr %s360, 8
          %s362 = scalar_lea.vmem %s0, %s361
        $region64: #{tpu_custom_call.1} parent=59 // pred_fallthru
          _
      $region60: #{tpu_custom_call.1} parent=5 // pred_fallthru
        _
      %p363 = scmp.le.s32.totalorder 1, %s21
      %p364 = scmp.lt.s32.totalorder %s21, 3
      %p365 = pnand %p363, %p364
      %p366 = pneg %p365
      // Predicated region
      $region65: #{tpu_custom_call.1} parent=5 // pred_check
        _
      $region66: #{tpu_custom_call.1} parent=5 // pred_check_branch
        %368 = sbr.rel (%p365) target = $region68
      $region67: #{tpu_custom_call.1} parent=5 // pred_region
        %s369 = ssub.s32 %s21, 1
        %p370 = scmp.lt.s32.totalorder %s26, 1
        %s371 = scalar_select %p370, %s26, 1
        %s372 = smul.addr %s371, 8
        %s373 = scalar_lea.vmem %s0, %s372
        %p374 = pneg %p47
        %p375 = pneg %p44
        %p376 = pneg %p68
        %p377 = pneg %p65
        %p378 = pneg %p89
        %p379 = pneg %p86
        %p380 = pneg %p110
        %p381 = pneg %p107
        %p382 = pneg %p131
        %p383 = pneg %p128
        %p384 = pneg %p152
        %p385 = pneg %p149
        %p386 = pneg %p173
        %p387 = pneg %p170
        %p388 = pneg %p194
        %p389 = pneg %p191
        %p390 = pneg %p215
        %p391 = pneg %p212
        %p392 = pneg %p236
        %p393 = pneg %p233
        %p394 = pneg %p257
        %p395 = pneg %p254
        %p396 = pneg %p278
        %p397 = pneg %p275
        %p398 = pneg %p304
        %p399 = pneg %p301
        %s400 = sand.u32 %s291, 1
        %s401 = scalar_lea.sflag [#allocation4], %s400
        %s402 = sand.u32 %s291, 1
        %s403 = smul.addr %s402, 8
        %s404 = scalar_lea.vmem [#allocation3], %s403
        %p405 = scmp.lt.s32.totalorder %s26, 1
        %s406 = scalar_select %p405, %s26, 1
        %s407 = smul.addr %s406, 8
        %s408 = scalar_lea.vmem %s0, %s407
        %v409 = vld [vmem:[%s408] sm:$0xff]
        %v410 = vld [vmem:[%s1] sm:$0x1]
        %v411 = vld [vmem:[%s2] sm:$0x1]
        %vm412 = vcmask 261120
        %v413 = vsel %vm412, %v409, 0.0
        %414 = vadd.xlane.f32.xlu0 %v413
        %v415 = vpop.xlane.xlu0 %414
        %v416 = vrcp.pop 32.0
        %v417 = vmul.f32 %v415, %v416
        %v418 = vsub.f32 %v409, %v417
        %v419 = vmul.f32 %v418, %v418
        %v420 = vsel %vm412, %v419, 0.0
        %421 = vadd.xlane.f32.xlu0 %v420
        %v422 = vpop.xlane.xlu0 %421
        %v423 = vmul.f32 %v422, %v416
        %v424 = vadd.f32 %v423, 1e-05
        %v425 = vrsqrt.pop %v424
        %v426 = vmul.f32 %v418, %v425
        %v428 = vlaneseq
        %v429 = vshrl.u32 %v428, 7
        %v430 = vsub.s32 0, %v429
        %v431 = vrot.slane %v410, %v430
        %v433 = vmul.f32 %v426, %v431
        %v435 = vlaneseq
        %v436 = vshrl.u32 %v435, 7
        %v437 = vsub.s32 0, %v436
        %v438 = vrot.slane %v411, %v437
        %v440 = vadd.f32 %v433, %v438
        %v441 = vld [vmem:[%s3] sm:$0xff]
        %v442 = vld [vmem:[%s3 + $0x8] sm:$0xff]
        %v443 = vld [vmem:[%s3 + $0x10] sm:$0xff]
        %v444 = vld [vmem:[%s3 + $0x18] sm:$0xff]
        %v446 = vsel %vm412, %v440, 0
        %448 = vmatprep.subr.mxu0 0.0
        %449 = vmatpush1.msra.mxu0 0.0
        %450 = vmatprep.subr.mxu0 0.0
        %451 = vmatpush1.msra.mxu0 0.0
        %452 = vmatprep.subr.mxu0 0.0
        %453 = vmatpush1.msra.mxu0 0.0
        %454 = vmatprep.subr.mxu0 0.0
        %455 = vmatpush1.msra.mxu0 0.0
        %456 = vmatprep.subr.mxu0 0.0
        %457 = vmatpush1.msra.mxu0 0.0
        %458 = vmatprep.subr.mxu0 0.0
        %459 = vmatpush1.msra.mxu0 0.0
        %460 = vmatprep.subr.mxu0 0.0
        %461 = vmatpush1.msra.mxu0 0.0
        %462 = vmatprep.subr.mxu0 0.0
        %463 = vmatpush1.msra.mxu0 0.0
        %464 = vmatprep.subr.mxu0 0.0
        %465 = vmatpush1.msra.mxu0 0.0
        %466 = vmatprep.subr.mxu0 0.0
        %467 = vmatpush1.msra.mxu0 0.0
        %468 = vmatprep.subr.mxu0 0.0
        %469 = vmatpush1.msra.mxu0 0.0
        %470 = vmatprep.subr.mxu0 0.0
        %471 = vmatpush1.msra.mxu0 0.0
        %472 = vmatprep.subr.mxu0 0.0
        %473 = vmatpush1.msra.mxu0 %v444
        %474 = vmatprep.subr.mxu0 0.0
        %475 = vmatpush1.msra.mxu0 %v443
        %476 = vmatprep.subr.mxu0 0.0
        %477 = vmatpush1.msra.mxu0 %v442
        %478 = vmatprep.subr.mxu0 0.0
        %479 = vmatpush1.msra.mxu0 %v441
        %480 = vmatprep.subr.mxu0 0.0
        %481 = vmatpush2.msra.mxu0 0.0
        %482 = vmatprep.subr.mxu0 0.0
        %483 = vmatpush2.msra.mxu0 0.0
        %484 = vmatprep.subr.mxu0 0.0
        %485 = vmatpush2.msra.mxu0 0.0
        %486 = vmatprep.subr.mxu0 0.0
        %487 = vmatpush2.msra.mxu0 0.0
        %488 = vmatprep.subr.mxu0 0.0
        %489 = vmatpush2.msra.mxu0 0.0
        %490 = vmatprep.subr.mxu0 0.0
        %491 = vmatpush2.msra.mxu0 0.0
        %492 = vmatprep.subr.mxu0 0.0
        %493 = vmatpush2.msra.mxu0 0.0
        %494 = vmatprep.subr.mxu0 0.0
        %495 = vmatpush2.msra.mxu0 0.0
        %496 = vmatprep.subr.mxu0 0.0
        %497 = vmatpush2.msra.mxu0 0.0
        %498 = vmatprep.subr.mxu0 0.0
        %499 = vmatpush2.msra.mxu0 0.0
        %500 = vmatprep.subr.mxu0 0.0
        %501 = vmatpush2.msra.mxu0 0.0
        %502 = vmatprep.subr.mxu0 0.0
        %503 = vmatpush2.msra.mxu0 0.0
        %504 = vmatprep.subr.mxu0 0.0
        %505 = vmatpush2.msra.mxu0 0.0
        %506 = vmatprep.subr.mxu0 0.0
        %507 = vmatpush2.msra.mxu0 0.0
        %508 = vmatprep.subr.mxu0 0.0
        %509 = vmatpush2.msra.mxu0 0.0
        %510 = vmatprep.subr.mxu0 0.0
        %511 = vmatpush2.msra.mxu0 0.0
        %512 = vmatprep.mubr.f32.mxu0 0.0
        %513 = vmatmul.mubr.f32.gmra.mxu0 %v446
        %v514 = vpop.f32.mrf.mxu0
        %v515 = vadd.f32 0.0, %v514
        %v516 = vpop.f32.mrf.mxu0
        %517 = vdwg.mxu0
        %519 = vrot.lane.b32.xlu0 %v515, 96
        %v520 = vpop.permute.xlu0 %519
        %vm521 = vcmask 64512
        %v522 = vsel %vm521, %v515, 0
        %v524 = vsel %vm521, %v520, 0
        %526 = vmatprep.subr.mxu0 0.0
        %527 = vmatpush1.xpose.msra.mxu0 0.0
        %528 = vmatprep.subr.mxu0 0.0
        %529 = vmatpush1.xpose.msra.mxu0 0.0
        %530 = vmatprep.subr.mxu0 0.0
        %531 = vmatpush1.xpose.msra.mxu0 0.0
        %532 = vmatprep.subr.mxu0 0.0
        %533 = vmatpush1.xpose.msra.mxu0 0.0
        %534 = vmatprep.subr.mxu0 0.0
        %535 = vmatpush1.xpose.msra.mxu0 0.0
        %536 = vmatprep.subr.mxu0 0.0
        %537 = vmatpush1.xpose.msra.mxu0 0.0
        %538 = vmatprep.subr.mxu0 0.0
        %539 = vmatpush1.xpose.msra.mxu0 0.0
        %540 = vmatprep.subr.mxu0 0.0
        %541 = vmatpush1.xpose.msra.mxu0 0.0
        %542 = vmatprep.subr.mxu0 0.0
        %543 = vmatpush1.xpose.msra.mxu0 0.0
        %544 = vmatprep.subr.mxu0 0.0
        %545 = vmatpush1.xpose.msra.mxu0 0.0
        %546 = vmatprep.subr.mxu0 0.0
        %547 = vmatpush1.xpose.msra.mxu0 0.0
        %548 = vmatprep.subr.mxu0 0.0
        %549 = vmatpush1.xpose.msra.mxu0 0.0
        %550 = vmatprep.subr.mxu0 0.0
        %551 = vmatpush1.xpose.msra.mxu0 0.0
        %552 = vmatprep.subr.mxu0 0.0
        %553 = vmatpush1.xpose.msra.mxu0 0.0
        %554 = vmatprep.subr.mxu0 0.0
        %555 = vmatpush1.xpose.msra.mxu0 0.0
        %556 = vmatprep.subr.mxu0 0.0
        %557 = vmatpush1.xpose.msra.mxu0 %v524
        %558 = vmatprep.subr.mxu0 0.0
        %559 = vmatpush2.xpose.msra.mxu0 0.0
        %560 = vmatprep.subr.mxu0 0.0
        %561 = vmatpush2.xpose.msra.mxu0 0.0
        %562 = vmatprep.subr.mxu0 0.0
        %563 = vmatpush2.xpose.msra.mxu0 0.0
        %564 = vmatprep.subr.mxu0 0.0
        %565 = vmatpush2.xpose.msra.mxu0 0.0
        %566 = vmatprep.subr.mxu0 0.0
        %567 = vmatpush2.xpose.msra.mxu0 0.0
        %568 = vmatprep.subr.mxu0 0.0
        %569 = vmatpush2.xpose.msra.mxu0 0.0
        %570 = vmatprep.subr.mxu0 0.0
        %571 = vmatpush2.xpose.msra.mxu0 0.0
        %572 = vmatprep.subr.mxu0 0.0
        %573 = vmatpush2.xpose.msra.mxu0 0.0
        %574 = vmatprep.subr.mxu0 0.0
        %575 = vmatpush2.xpose.msra.mxu0 0.0
        %576 = vmatprep.subr.mxu0 0.0
        %577 = vmatpush2.xpose.msra.mxu0 0.0
        %578 = vmatprep.subr.mxu0 0.0
        %579 = vmatpush2.xpose.msra.mxu0 0.0
        %580 = vmatprep.subr.mxu0 0.0
        %581 = vmatpush2.xpose.msra.mxu0 0.0
        %582 = vmatprep.subr.mxu0 0.0
        %583 = vmatpush2.xpose.msra.mxu0 0.0
        %584 = vmatprep.subr.mxu0 0.0
        %585 = vmatpush2.xpose.msra.mxu0 0.0
        %586 = vmatprep.subr.mxu0 0.0
        %587 = vmatpush2.xpose.msra.mxu0 0.0
        %588 = vmatprep.subr.mxu0 0.0
        %589 = vmatpush2.xpose.msra.mxu0 0.0
        %590 = vmatprep.mubr.f32.mxu0 0.0
        %591 = vmatmul.mubr.f32.gmra.mxu0 %v522
        %v592 = vpop.f32.mrf.mxu0
        %v593 = vadd.f32 0.0, %v592
        %v594 = vpop.f32.mrf.mxu0
        %595 = vdwg.mxu0
        %v596 = vsel %vm521, %v593, -inf
        %597 = vmax.xlane.f32.xlu0 %v596
        %v598 = vpop.xlane.xlu0 %597
        %v599 = vsub.f32 %v593, %v598
        %v600 = vmul.f32 %v599, 1.442695
        %v601 = vpow.pop %v600
        %v602 = vsel %vm521, %v601, 0.0
        %603 = vadd.xlane.f32.xlu0 %v602
        %v604 = vpop.xlane.xlu0 %603
        %v605 = vrcp.pop %v604
        %v606 = vmul.f32 %v601, %v605
        %607 = vrot.lane.b32.xlu0 %v515, 64
        %v608 = vpop.permute.xlu0 %607
        %v611 = vsel %vm521, %v606, 0
        %613 = vmatprep.subr.mxu0 0.0
        %614 = vmatpush1.msra.mxu0 0.0
        %615 = vmatprep.subr.mxu0 0.0
        %616 = vmatpush1.msra.mxu0 0.0
        %617 = vmatprep.subr.mxu0 0.0
        %618 = vmatpush1.msra.mxu0 0.0
        %619 = vmatprep.subr.mxu0 0.0
        %620 = vmatpush1.msra.mxu0 0.0
        %621 = vmatprep.subr.mxu0 0.0
        %622 = vmatpush1.msra.mxu0 0.0
        %623 = vmatprep.subr.mxu0 0.0
        %624 = vmatpush1.msra.mxu0 0.0
        %625 = vmatprep.subr.mxu0 0.0
        %626 = vmatpush1.msra.mxu0 0.0
        %627 = vmatprep.subr.mxu0 0.0
        %628 = vmatpush1.msra.mxu0 0.0
        %629 = vmatprep.subr.mxu0 0.0
        %630 = vmatpush1.msra.mxu0 0.0
        %631 = vmatprep.subr.mxu0 0.0
        %632 = vmatpush1.msra.mxu0 0.0
        %633 = vmatprep.subr.mxu0 0.0
        %634 = vmatpush1.msra.mxu0 0.0
        %635 = vmatprep.subr.mxu0 0.0
        %636 = vmatpush1.msra.mxu0 0.0
        %637 = vmatprep.subr.mxu0 0.0
        %638 = vmatpush1.msra.mxu0 0.0
        %639 = vmatprep.subr.mxu0 0.0
        %640 = vmatpush1.msra.mxu0 0.0
        %641 = vmatprep.subr.mxu0 0.0
        %642 = vmatpush1.msra.mxu0 0.0
        %643 = vmatprep.subr.mxu0 0.0
        %644 = vmatpush1.msra.mxu0 %v608
        %645 = vmatprep.subr.mxu0 0.0
        %646 = vmatpush2.msra.mxu0 0.0
        %647 = vmatprep.subr.mxu0 0.0
        %648 = vmatpush2.msra.mxu0 0.0
        %649 = vmatprep.subr.mxu0 0.0
        %650 = vmatpush2.msra.mxu0 0.0
        %651 = vmatprep.subr.mxu0 0.0
        %652 = vmatpush2.msra.mxu0 0.0
        %653 = vmatprep.subr.mxu0 0.0
        %654 = vmatpush2.msra.mxu0 0.0
        %655 = vmatprep.subr.mxu0 0.0
        %656 = vmatpush2.msra.mxu0 0.0
        %657 = vmatprep.subr.mxu0 0.0
        %658 = vmatpush2.msra.mxu0 0.0
        %659 = vmatprep.subr.mxu0 0.0
        %660 = vmatpush2.msra.mxu0 0.0
        %661 = vmatprep.subr.mxu0 0.0
        %662 = vmatpush2.msra.mxu0 0.0
        %663 = vmatprep.subr.mxu0 0.0
        %664 = vmatpush2.msra.mxu0 0.0
        %665 = vmatprep.subr.mxu0 0.0
        %666 = vmatpush2.msra.mxu0 0.0
        %667 = vmatprep.subr.mxu0 0.0
        %668 = vmatpush2.msra.mxu0 0.0
        %669 = vmatprep.subr.mxu0 0.0
        %670 = vmatpush2.msra.mxu0 0.0
        %671 = vmatprep.subr.mxu0 0.0
        %672 = vmatpush2.msra.mxu0 0.0
        %673 = vmatprep.subr.mxu0 0.0
        %674 = vmatpush2.msra.mxu0 0.0
        %675 = vmatprep.subr.mxu0 0.0
        %676 = vmatpush2.msra.mxu0 0.0
        %677 = vmatprep.mubr.f32.mxu0 0.0
        %678 = vmatmul.mubr.f32.gmra.mxu0 %v611
        %v679 = vpop.f32.mrf.mxu0
        %v680 = vadd.f32 0.0, %v679
        %v681 = vpop.f32.mrf.mxu0
        %682 = vdwg.mxu0
        %683 = vst.msk [vmem:[#allocation2] sm:$0xff] %vm521, %v680
        %684 = vrot.lane.b32.xlu0 %v515, 120
        %v685 = vpop.permute.xlu0 %684
        %686 = vrot.lane.b32.xlu0 %v515, 88
        %v687 = vpop.permute.xlu0 %686
        %v688 = vsel %vm521, %v685, 0
        %v690 = vsel %vm521, %v687, 0
        %692 = vmatprep.subr.mxu0 0.0
        %693 = vmatpush1.xpose.msra.mxu0 0.0
        %694 = vmatprep.subr.mxu0 0.0
        %695 = vmatpush1.xpose.msra.mxu0 0.0
        %696 = vmatprep.subr.mxu0 0.0
        %697 = vmatpush1.xpose.msra.mxu0 0.0
        %698 = vmatprep.subr.mxu0 0.0
        %699 = vmatpush1.xpose.msra.mxu0 0.0
        %700 = vmatprep.subr.mxu0 0.0
        %701 = vmatpush1.xpose.msra.mxu0 0.0
        %702 = vmatprep.subr.mxu0 0.0
        %703 = vmatpush1.xpose.msra.mxu0 0.0
        %704 = vmatprep.subr.mxu0 0.0
        %705 = vmatpush1.xpose.msra.mxu0 0.0
        %706 = vmatprep.subr.mxu0 0.0
        %707 = vmatpush1.xpose.msra.mxu0 0.0
        %708 = vmatprep.subr.mxu0 0.0
        %709 = vmatpush1.xpose.msra.mxu0 0.0
        %710 = vmatprep.subr.mxu0 0.0
        %711 = vmatpush1.xpose.msra.mxu0 0.0
        %712 = vmatprep.subr.mxu0 0.0
        %713 = vmatpush1.xpose.msra.mxu0 0.0
        %714 = vmatprep.subr.mxu0 0.0
        %715 = vmatpush1.xpose.msra.mxu0 0.0
        %716 = vmatprep.subr.mxu0 0.0
        %717 = vmatpush1.xpose.msra.mxu0 0.0
        %718 = vmatprep.subr.mxu0 0.0
        %719 = vmatpush1.xpose.msra.mxu0 0.0
        %720 = vmatprep.subr.mxu0 0.0
        %721 = vmatpush1.xpose.msra.mxu0 0.0
        %722 = vmatprep.subr.mxu0 0.0
        %723 = vmatpush1.xpose.msra.mxu0 %v690
        %724 = vmatprep.subr.mxu0 0.0
        %725 = vmatpush2.xpose.msra.mxu0 0.0
        %726 = vmatprep.subr.mxu0 0.0
        %727 = vmatpush2.xpose.msra.mxu0 0.0
        %728 = vmatprep.subr.mxu0 0.0
        %729 = vmatpush2.xpose.msra.mxu0 0.0
        %730 = vmatprep.subr.mxu0 0.0
        %731 = vmatpush2.xpose.msra.mxu0 0.0
        %732 = vmatprep.subr.mxu0 0.0
        %733 = vmatpush2.xpose.msra.mxu0 0.0
        %734 = vmatprep.subr.mxu0 0.0
        %735 = vmatpush2.xpose.msra.mxu0 0.0
        %736 = vmatprep.subr.mxu0 0.0
        %737 = vmatpush2.xpose.msra.mxu0 0.0
        %738 = vmatprep.subr.mxu0 0.0
        %739 = vmatpush2.xpose.msra.mxu0 0.0
        %740 = vmatprep.subr.mxu0 0.0
        %741 = vmatpush2.xpose.msra.mxu0 0.0
        %742 = vmatprep.subr.mxu0 0.0
        %743 = vmatpush2.xpose.msra.mxu0 0.0
        %744 = vmatprep.subr.mxu0 0.0
        %745 = vmatpush2.xpose.msra.mxu0 0.0
        %746 = vmatprep.subr.mxu0 0.0
        %747 = vmatpush2.xpose.msra.mxu0 0.0
        %748 = vmatprep.subr.mxu0 0.0
        %749 = vmatpush2.xpose.msra.mxu0 0.0
        %750 = vmatprep.subr.mxu0 0.0
        %751 = vmatpush2.xpose.msra.mxu0 0.0
        %752 = vmatprep.subr.mxu0 0.0
        %753 = vmatpush2.xpose.msra.mxu0 0.0
        %754 = vmatprep.subr.mxu0 0.0
        %755 = vmatpush2.xpose.msra.mxu0 0.0
        %756 = vmatprep.mubr.f32.mxu0 0.0
        %757 = vmatmul.mubr.f32.gmra.mxu0 %v688
        %v758 = vpop.f32.mrf.mxu0
        %v759 = vadd.f32 0.0, %v758
        %v760 = vpop.f32.mrf.mxu0
        %761 = vdwg.mxu0
        %v762 = vsel %vm521, %v759, -inf
        %763 = vmax.xlane.f32.xlu0 %v762
        %v764 = vpop.xlane.xlu0 %763
        %v765 = vsub.f32 %v759, %v764
        %v766 = vmul.f32 %v765, 1.442695
        %v767 = vpow.pop %v766
        %v768 = vsel %vm521, %v767, 0.0
        %769 = vadd.xlane.f32.xlu0 %v768
        %v770 = vpop.xlane.xlu0 %769
        %v771 = vrcp.pop %v770
        %v772 = vmul.f32 %v767, %v771
        %773 = vrot.lane.b32.xlu0 %v515, 56
        %v774 = vpop.permute.xlu0 %773
        %v777 = vsel %vm521, %v772, 0
        %779 = vmatprep.subr.mxu0 0.0
        %780 = vmatpush1.msra.mxu0 0.0
        %781 = vmatprep.subr.mxu0 0.0
        %782 = vmatpush1.msra.mxu0 0.0
        %783 = vmatprep.subr.mxu0 0.0
        %784 = vmatpush1.msra.mxu0 0.0
        %785 = vmatprep.subr.mxu0 0.0
        %786 = vmatpush1.msra.mxu0 0.0
        %787 = vmatprep.subr.mxu0 0.0
        %788 = vmatpush1.msra.mxu0 0.0
        %789 = vmatprep.subr.mxu0 0.0
        %790 = vmatpush1.msra.mxu0 0.0
        %791 = vmatprep.subr.mxu0 0.0
        %792 = vmatpush1.msra.mxu0 0.0
        %793 = vmatprep.subr.mxu0 0.0
        %794 = vmatpush1.msra.mxu0 0.0
        %795 = vmatprep.subr.mxu0 0.0
        %796 = vmatpush1.msra.mxu0 0.0
        %797 = vmatprep.subr.mxu0 0.0
        %798 = vmatpush1.msra.mxu0 0.0
        %799 = vmatprep.subr.mxu0 0.0
        %800 = vmatpush1.msra.mxu0 0.0
        %801 = vmatprep.subr.mxu0 0.0
        %802 = vmatpush1.msra.mxu0 0.0
        %803 = vmatprep.subr.mxu0 0.0
        %804 = vmatpush1.msra.mxu0 0.0
        %805 = vmatprep.subr.mxu0 0.0
        %806 = vmatpush1.msra.mxu0 0.0
        %807 = vmatprep.subr.mxu0 0.0
        %808 = vmatpush1.msra.mxu0 0.0
        %809 = vmatprep.subr.mxu0 0.0
        %810 = vmatpush1.msra.mxu0 %v774
        %811 = vmatprep.subr.mxu0 0.0
        %812 = vmatpush2.msra.mxu0 0.0
        %813 = vmatprep.subr.mxu0 0.0
        %814 = vmatpush2.msra.mxu0 0.0
        %815 = vmatprep.subr.mxu0 0.0
        %816 = vmatpush2.msra.mxu0 0.0
        %817 = vmatprep.subr.mxu0 0.0
        %818 = vmatpush2.msra.mxu0 0.0
        %819 = vmatprep.subr.mxu0 0.0
        %820 = vmatpush2.msra.mxu0 0.0
        %821 = vmatprep.subr.mxu0 0.0
        %822 = vmatpush2.msra.mxu0 0.0
        %823 = vmatprep.subr.mxu0 0.0
        %824 = vmatpush2.msra.mxu0 0.0
        %825 = vmatprep.subr.mxu0 0.0
        %826 = vmatpush2.msra.mxu0 0.0
        %827 = vmatprep.subr.mxu0 0.0
        %828 = vmatpush2.msra.mxu0 0.0
        %829 = vmatprep.subr.mxu0 0.0
        %830 = vmatpush2.msra.mxu0 0.0
        %831 = vmatprep.subr.mxu0 0.0
        %832 = vmatpush2.msra.mxu0 0.0
        %833 = vmatprep.subr.mxu0 0.0
        %834 = vmatpush2.msra.mxu0 0.0
        %835 = vmatprep.subr.mxu0 0.0
        %836 = vmatpush2.msra.mxu0 0.0
        %837 = vmatprep.subr.mxu0 0.0
        %838 = vmatpush2.msra.mxu0 0.0
        %839 = vmatprep.subr.mxu0 0.0
        %840 = vmatpush2.msra.mxu0 0.0
        %841 = vmatprep.subr.mxu0 0.0
        %842 = vmatpush2.msra.mxu0 0.0
        %843 = vmatprep.mubr.f32.mxu0 0.0
        %844 = vmatmul.mubr.f32.gmra.mxu0 %v777
        %v845 = vpop.f32.mrf.mxu0
        %v846 = vadd.f32 0.0, %v845
        %v847 = vpop.f32.mrf.mxu0
        %848 = vdwg.mxu0
        %850 = vrot.lane.b32.xlu0 %v846, 8
        %v851 = vpop.permute.xlu0 %850
        %vm853 = vcmask 130112
        %854 = vst.msk [vmem:[#allocation2] sm:$0xff] %vm853, %v851
        %855 = vrot.lane.b32.xlu0 %v515, 112
        %v856 = vpop.permute.xlu0 %855
        %857 = vrot.lane.b32.xlu0 %v515, 80
        %v858 = vpop.permute.xlu0 %857
        %v859 = vsel %vm521, %v856, 0
        %v861 = vsel %vm521, %v858, 0
        %863 = vmatprep.subr.mxu0 0.0
        %864 = vmatpush1.xpose.msra.mxu0 0.0
        %865 = vmatprep.subr.mxu0 0.0
        %866 = vmatpush1.xpose.msra.mxu0 0.0
        %867 = vmatprep.subr.mxu0 0.0
        %868 = vmatpush1.xpose.msra.mxu0 0.0
        %869 = vmatprep.subr.mxu0 0.0
        %870 = vmatpush1.xpose.msra.mxu0 0.0
        %871 = vmatprep.subr.mxu0 0.0
        %872 = vmatpush1.xpose.msra.mxu0 0.0
        %873 = vmatprep.subr.mxu0 0.0
        %874 = vmatpush1.xpose.msra.mxu0 0.0
        %875 = vmatprep.subr.mxu0 0.0
        %876 = vmatpush1.xpose.msra.mxu0 0.0
        %877 = vmatprep.subr.mxu0 0.0
        %878 = vmatpush1.xpose.msra.mxu0 0.0
        %879 = vmatprep.subr.mxu0 0.0
        %880 = vmatpush1.xpose.msra.mxu0 0.0
        %881 = vmatprep.subr.mxu0 0.0
        %882 = vmatpush1.xpose.msra.mxu0 0.0
        %883 = vmatprep.subr.mxu0 0.0
        %884 = vmatpush1.xpose.msra.mxu0 0.0
        %885 = vmatprep.subr.mxu0 0.0
        %886 = vmatpush1.xpose.msra.mxu0 0.0
        %887 = vmatprep.subr.mxu0 0.0
        %888 = vmatpush1.xpose.msra.mxu0 0.0
        %889 = vmatprep.subr.mxu0 0.0
        %890 = vmatpush1.xpose.msra.mxu0 0.0
        %891 = vmatprep.subr.mxu0 0.0
        %892 = vmatpush1.xpose.msra.mxu0 0.0
        %893 = vmatprep.subr.mxu0 0.0
        %894 = vmatpush1.xpose.msra.mxu0 %v861
        %895 = vmatprep.subr.mxu0 0.0
        %896 = vmatpush2.xpose.msra.mxu0 0.0
        %897 = vmatprep.subr.mxu0 0.0
        %898 = vmatpush2.xpose.msra.mxu0 0.0
        %899 = vmatprep.subr.mxu0 0.0
        %900 = vmatpush2.xpose.msra.mxu0 0.0
        %901 = vmatprep.subr.mxu0 0.0
        %902 = vmatpush2.xpose.msra.mxu0 0.0
        %903 = vmatprep.subr.mxu0 0.0
        %904 = vmatpush2.xpose.msra.mxu0 0.0
        %905 = vmatprep.subr.mxu0 0.0
        %906 = vmatpush2.xpose.msra.mxu0 0.0
        %907 = vmatprep.subr.mxu0 0.0
        %908 = vmatpush2.xpose.msra.mxu0 0.0
        %909 = vmatprep.subr.mxu0 0.0
        %910 = vmatpush2.xpose.msra.mxu0 0.0
        %911 = vmatprep.subr.mxu0 0.0
        %912 = vmatpush2.xpose.msra.mxu0 0.0
        %913 = vmatprep.subr.mxu0 0.0
        %914 = vmatpush2.xpose.msra.mxu0 0.0
        %915 = vmatprep.subr.mxu0 0.0
        %916 = vmatpush2.xpose.msra.mxu0 0.0
        %917 = vmatprep.subr.mxu0 0.0
        %918 = vmatpush2.xpose.msra.mxu0 0.0
        %919 = vmatprep.subr.mxu0 0.0
        %920 = vmatpush2.xpose.msra.mxu0 0.0
        %921 = vmatprep.subr.mxu0 0.0
        %922 = vmatpush2.xpose.msra.mxu0 0.0
        %923 = vmatprep.subr.mxu0 0.0
        %924 = vmatpush2.xpose.msra.mxu0 0.0
        %925 = vmatprep.subr.mxu0 0.0
        %926 = vmatpush2.xpose.msra.mxu0 0.0
        %927 = vmatprep.mubr.f32.mxu0 0.0
        %928 = vmatmul.mubr.f32.gmra.mxu0 %v859
        %v929 = vpop.f32.mrf.mxu0
        %v930 = vadd.f32 0.0, %v929
        %v931 = vpop.f32.mrf.mxu0
        %932 = vdwg.mxu0
        %v933 = vsel %vm521, %v930, -inf
        %934 = vmax.xlane.f32.xlu0 %v933
        %v935 = vpop.xlane.xlu0 %934
        %v936 = vsub.f32 %v930, %v935
        %v937 = vmul.f32 %v936, 1.442695
        %v938 = vpow.pop %v937
        %v939 = vsel %vm521, %v938, 0.0
        %940 = vadd.xlane.f32.xlu0 %v939
        %v941 = vpop.xlane.xlu0 %940
        %v942 = vrcp.pop %v941
        %v943 = vmul.f32 %v938, %v942
        %944 = vrot.lane.b32.xlu0 %v515, 48
        %v945 = vpop.permute.xlu0 %944
        %v948 = vsel %vm521, %v943, 0
        %950 = vmatprep.subr.mxu0 0.0
        %951 = vmatpush1.msra.mxu0 0.0
        %952 = vmatprep.subr.mxu0 0.0
        %953 = vmatpush1.msra.mxu0 0.0
        %954 = vmatprep.subr.mxu0 0.0
        %955 = vmatpush1.msra.mxu0 0.0
        %956 = vmatprep.subr.mxu0 0.0
        %957 = vmatpush1.msra.mxu0 0.0
        %958 = vmatprep.subr.mxu0 0.0
        %959 = vmatpush1.msra.mxu0 0.0
        %960 = vmatprep.subr.mxu0 0.0
        %961 = vmatpush1.msra.mxu0 0.0
        %962 = vmatprep.subr.mxu0 0.0
        %963 = vmatpush1.msra.mxu0 0.0
        %964 = vmatprep.subr.mxu0 0.0
        %965 = vmatpush1.msra.mxu0 0.0
        %966 = vmatprep.subr.mxu0 0.0
        %967 = vmatpush1.msra.mxu0 0.0
        %968 = vmatprep.subr.mxu0 0.0
        %969 = vmatpush1.msra.mxu0 0.0
        %970 = vmatprep.subr.mxu0 0.0
        %971 = vmatpush1.msra.mxu0 0.0
        %972 = vmatprep.subr.mxu0 0.0
        %973 = vmatpush1.msra.mxu0 0.0
        %974 = vmatprep.subr.mxu0 0.0
        %975 = vmatpush1.msra.mxu0 0.0
        %976 = vmatprep.subr.mxu0 0.0
        %977 = vmatpush1.msra.mxu0 0.0
        %978 = vmatprep.subr.mxu0 0.0
        %979 = vmatpush1.msra.mxu0 0.0
        %980 = vmatprep.subr.mxu0 0.0
        %981 = vmatpush1.msra.mxu0 %v945
        %982 = vmatprep.subr.mxu0 0.0
        %983 = vmatpush2.msra.mxu0 0.0
        %984 = vmatprep.subr.mxu0 0.0
        %985 = vmatpush2.msra.mxu0 0.0
        %986 = vmatprep.subr.mxu0 0.0
        %987 = vmatpush2.msra.mxu0 0.0
        %988 = vmatprep.subr.mxu0 0.0
        %989 = vmatpush2.msra.mxu0 0.0
        %990 = vmatprep.subr.mxu0 0.0
        %991 = vmatpush2.msra.mxu0 0.0
        %992 = vmatprep.subr.mxu0 0.0
        %993 = vmatpush2.msra.mxu0 0.0
        %994 = vmatprep.subr.mxu0 0.0
        %995 = vmatpush2.msra.mxu0 0.0
        %996 = vmatprep.subr.mxu0 0.0
        %997 = vmatpush2.msra.mxu0 0.0
        %998 = vmatprep.subr.mxu0 0.0
        %999 = vmatpush2.msra.mxu0 0.0
        %1000 = vmatprep.subr.mxu0 0.0
        %1001 = vmatpush2.msra.mxu0 0.0
        %1002 = vmatprep.subr.mxu0 0.0
        %1003 = vmatpush2.msra.mxu0 0.0
        %1004 = vmatprep.subr.mxu0 0.0
        %1005 = vmatpush2.msra.mxu0 0.0
        %1006 = vmatprep.subr.mxu0 0.0
        %1007 = vmatpush2.msra.mxu0 0.0
        %1008 = vmatprep.subr.mxu0 0.0
        %1009 = vmatpush2.msra.mxu0 0.0
        %1010 = vmatprep.subr.mxu0 0.0
        %1011 = vmatpush2.msra.mxu0 0.0
        %1012 = vmatprep.subr.mxu0 0.0
        %1013 = vmatpush2.msra.mxu0 0.0
        %1014 = vmatprep.mubr.f32.mxu0 0.0
        %1015 = vmatmul.mubr.f32.gmra.mxu0 %v948
        %v1016 = vpop.f32.mrf.mxu0
        %v1017 = vadd.f32 0.0, %v1016
        %v1018 = vpop.f32.mrf.mxu0
        %1019 = vdwg.mxu0
        %1021 = vrot.lane.b32.xlu0 %v1017, 16
        %v1022 = vpop.permute.xlu0 %1021
        %vm1024 = vcmask 195712
        %1025 = vst.msk [vmem:[#allocation2] sm:$0xff] %vm1024, %v1022
        %1026 = vrot.lane.b32.xlu0 %v515, 104
        %v1027 = vpop.permute.xlu0 %1026
        %1028 = vrot.lane.b32.xlu0 %v515, 72
        %v1029 = vpop.permute.xlu0 %1028
        %v1030 = vsel %vm521, %v1027, 0
        %v1032 = vsel %vm521, %v1029, 0
        %1034 = vmatprep.subr.mxu0 0.0
        %1035 = vmatpush1.xpose.msra.mxu0 0.0
        %1036 = vmatprep.subr.mxu0 0.0
        %1037 = vmatpush1.xpose.msra.mxu0 0.0
        %1038 = vmatprep.subr.mxu0 0.0
        %1039 = vmatpush1.xpose.msra.mxu0 0.0
        %1040 = vmatprep.subr.mxu0 0.0
        %1041 = vmatpush1.xpose.msra.mxu0 0.0
        %1042 = vmatprep.subr.mxu0 0.0
        %1043 = vmatpush1.xpose.msra.mxu0 0.0
        %1044 = vmatprep.subr.mxu0 0.0
        %1045 = vmatpush1.xpose.msra.mxu0 0.0
        %1046 = vmatprep.subr.mxu0 0.0
        %1047 = vmatpush1.xpose.msra.mxu0 0.0
        %1048 = vmatprep.subr.mxu0 0.0
        %1049 = vmatpush1.xpose.msra.mxu0 0.0
        %1050 = vmatprep.subr.mxu0 0.0
        %1051 = vmatpush1.xpose.msra.mxu0 0.0
        %1052 = vmatprep.subr.mxu0 0.0
        %1053 = vmatpush1.xpose.msra.mxu0 0.0
        %1054 = vmatprep.subr.mxu0 0.0
        %1055 = vmatpush1.xpose.msra.mxu0 0.0
        %1056 = vmatprep.subr.mxu0 0.0
        %1057 = vmatpush1.xpose.msra.mxu0 0.0
        %1058 = vmatprep.subr.mxu0 0.0
        %1059 = vmatpush1.xpose.msra.mxu0 0.0
        %1060 = vmatprep.subr.mxu0 0.0
        %1061 = vmatpush1.xpose.msra.mxu0 0.0
        %1062 = vmatprep.subr.mxu0 0.0
        %1063 = vmatpush1.xpose.msra.mxu0 0.0
        %1064 = vmatprep.subr.mxu0 0.0
        %1065 = vmatpush1.xpose.msra.mxu0 %v1032
        %1066 = vmatprep.subr.mxu0 0.0
        %1067 = vmatpush2.xpose.msra.mxu0 0.0
        %1068 = vmatprep.subr.mxu0 0.0
        %1069 = vmatpush2.xpose.msra.mxu0 0.0
        %1070 = vmatprep.subr.mxu0 0.0
        %1071 = vmatpush2.xpose.msra.mxu0 0.0
        %1072 = vmatprep.subr.mxu0 0.0
        %1073 = vmatpush2.xpose.msra.mxu0 0.0
        %1074 = vmatprep.subr.mxu0 0.0
        %1075 = vmatpush2.xpose.msra.mxu0 0.0
        %1076 = vmatprep.subr.mxu0 0.0
        %1077 = vmatpush2.xpose.msra.mxu0 0.0
        %1078 = vmatprep.subr.mxu0 0.0
        %1079 = vmatpush2.xpose.msra.mxu0 0.0
        %1080 = vmatprep.subr.mxu0 0.0
        %1081 = vmatpush2.xpose.msra.mxu0 0.0
        %1082 = vmatprep.subr.mxu0 0.0
        %1083 = vmatpush2.xpose.msra.mxu0 0.0
        %1084 = vmatprep.subr.mxu0 0.0
        %1085 = vmatpush2.xpose.msra.mxu0 0.0
        %1086 = vmatprep.subr.mxu0 0.0
        %1087 = vmatpush2.xpose.msra.mxu0 0.0
        %1088 = vmatprep.subr.mxu0 0.0
        %1089 = vmatpush2.xpose.msra.mxu0 0.0
        %1090 = vmatprep.subr.mxu0 0.0
        %1091 = vmatpush2.xpose.msra.mxu0 0.0
        %1092 = vmatprep.subr.mxu0 0.0
        %1093 = vmatpush2.xpose.msra.mxu0 0.0
        %1094 = vmatprep.subr.mxu0 0.0
        %1095 = vmatpush2.xpose.msra.mxu0 0.0
        %1096 = vmatprep.subr.mxu0 0.0
        %1097 = vmatpush2.xpose.msra.mxu0 0.0
        %1098 = vmatprep.mubr.f32.mxu0 0.0
        %1099 = vmatmul.mubr.f32.gmra.mxu0 %v1030
        %v1100 = vpop.f32.mrf.mxu0
        %v1101 = vadd.f32 0.0, %v1100
        %v1102 = vpop.f32.mrf.mxu0
        %1103 = vdwg.mxu0
        %v1104 = vsel %vm521, %v1101, -inf
        %1105 = vmax.xlane.f32.xlu0 %v1104
        %v1106 = vpop.xlane.xlu0 %1105
        %v1107 = vsub.f32 %v1101, %v1106
        %v1108 = vmul.f32 %v1107, 1.442695
        %v1109 = vpow.pop %v1108
        %v1110 = vsel %vm521, %v1109, 0.0
        %1111 = vadd.xlane.f32.xlu0 %v1110
        %v1112 = vpop.xlane.xlu0 %1111
        %v1113 = vrcp.pop %v1112
        %v1114 = vmul.f32 %v1109, %v1113
        %1115 = vrot.lane.b32.xlu0 %v515, 40
        %v1116 = vpop.permute.xlu0 %1115
        %v1119 = vsel %vm521, %v1114, 0
        %1121 = vmatprep.subr.mxu0 0.0
        %1122 = vmatpush1.msra.mxu0 0.0
        %1123 = vmatprep.subr.mxu0 0.0
        %1124 = vmatpush1.msra.mxu0 0.0
        %1125 = vmatprep.subr.mxu0 0.0
        %1126 = vmatpush1.msra.mxu0 0.0
        %1127 = vmatprep.subr.mxu0 0.0
        %1128 = vmatpush1.msra.mxu0 0.0
        %1129 = vmatprep.subr.mxu0 0.0
        %1130 = vmatpush1.msra.mxu0 0.0
        %1131 = vmatprep.subr.mxu0 0.0
        %1132 = vmatpush1.msra.mxu0 0.0
        %1133 = vmatprep.subr.mxu0 0.0
        %1134 = vmatpush1.msra.mxu0 0.0
        %1135 = vmatprep.subr.mxu0 0.0
        %1136 = vmatpush1.msra.mxu0 0.0
        %1137 = vmatprep.subr.mxu0 0.0
        %1138 = vmatpush1.msra.mxu0 0.0
        %1139 = vmatprep.subr.mxu0 0.0
        %1140 = vmatpush1.msra.mxu0 0.0
        %1141 = vmatprep.subr.mxu0 0.0
        %1142 = vmatpush1.msra.mxu0 0.0
        %1143 = vmatprep.subr.mxu0 0.0
        %1144 = vmatpush1.msra.mxu0 0.0
        %1145 = vmatprep.subr.mxu0 0.0
        %1146 = vmatpush1.msra.mxu0 0.0
        %1147 = vmatprep.subr.mxu0 0.0
        %1148 = vmatpush1.msra.mxu0 0.0
        %1149 = vmatprep.subr.mxu0 0.0
        %1150 = vmatpush1.msra.mxu0 0.0
        %1151 = vmatprep.subr.mxu0 0.0
        %1152 = vmatpush1.msra.mxu0 %v1116
        %1153 = vmatprep.subr.mxu0 0.0
        %1154 = vmatpush2.msra.mxu0 0.0
        %1155 = vmatprep.subr.mxu0 0.0
        %1156 = vmatpush2.msra.mxu0 0.0
        %1157 = vmatprep.subr.mxu0 0.0
        %1158 = vmatpush2.msra.mxu0 0.0
        %1159 = vmatprep.subr.mxu0 0.0
        %1160 = vmatpush2.msra.mxu0 0.0
        %1161 = vmatprep.subr.mxu0 0.0
        %1162 = vmatpush2.msra.mxu0 0.0
        %1163 = vmatprep.subr.mxu0 0.0
        %1164 = vmatpush2.msra.mxu0 0.0
        %1165 = vmatprep.subr.mxu0 0.0
        %1166 = vmatpush2.msra.mxu0 0.0
        %1167 = vmatprep.subr.mxu0 0.0
        %1168 = vmatpush2.msra.mxu0 0.0
        %1169 = vmatprep.subr.mxu0 0.0
        %1170 = vmatpush2.msra.mxu0 0.0
        %1171 = vmatprep.subr.mxu0 0.0
        %1172 = vmatpush2.msra.mxu0 0.0
        %1173 = vmatprep.subr.mxu0 0.0
        %1174 = vmatpush2.msra.mxu0 0.0
        %1175 = vmatprep.subr.mxu0 0.0
        %1176 = vmatpush2.msra.mxu0 0.0
        %1177 = vmatprep.subr.mxu0 0.0
        %1178 = vmatpush2.msra.mxu0 0.0
        %1179 = vmatprep.subr.mxu0 0.0
        %1180 = vmatpush2.msra.mxu0 0.0
        %1181 = vmatprep.subr.mxu0 0.0
        %1182 = vmatpush2.msra.mxu0 0.0
        %1183 = vmatprep.subr.mxu0 0.0
        %1184 = vmatpush2.msra.mxu0 0.0
        %1185 = vmatprep.mubr.f32.mxu0 0.0
        %1186 = vmatmul.mubr.f32.gmra.mxu0 %v1119
        %v1187 = vpop.f32.mrf.mxu0
        %v1188 = vadd.f32 0.0, %v1187
        %v1189 = vpop.f32.mrf.mxu0
        %1190 = vdwg.mxu0
        %1192 = vrot.lane.b32.xlu0 %v1188, 24
        %v1193 = vpop.permute.xlu0 %1192
        %vm1195 = vcmask 261312
        %1196 = vst.msk [vmem:[#allocation2] sm:$0xff] %vm1195, %v1193
        %v1197 = vld [vmem:[#allocation2] sm:$0xff]
        %v1198 = vld [vmem:[%s4] sm:$0xff]
        %v1199 = vld [vmem:[%s4 + $0x8] sm:$0xff]
        %v1200 = vld [vmem:[%s4 + $0x10] sm:$0xff]
        %v1201 = vld [vmem:[%s4 + $0x18] sm:$0xff]
        %v1202 = vld [vmem:[%s5] sm:$0x1]
        %v1204 = vlaneseq
        %v1205 = vshrl.u32 %v1204, 7
        %v1206 = vsub.s32 0, %v1205
        %v1207 = vrot.slane %v1202, %v1206
        %v1210 = vsel %vm412, %v1197, 0
        %1212 = vmatprep.subr.mxu0 0.0
        %1213 = vmatpush1.msra.mxu0 0.0
        %1214 = vmatprep.subr.mxu0 0.0
        %1215 = vmatpush1.msra.mxu0 0.0
        %1216 = vmatprep.subr.mxu0 0.0
        %1217 = vmatpush1.msra.mxu0 0.0
        %1218 = vmatprep.subr.mxu0 0.0
        %1219 = vmatpush1.msra.mxu0 0.0
        %1220 = vmatprep.subr.mxu0 0.0
        %1221 = vmatpush1.msra.mxu0 0.0
        %1222 = vmatprep.subr.mxu0 0.0
        %1223 = vmatpush1.msra.mxu0 0.0
        %1224 = vmatprep.subr.mxu0 0.0
        %1225 = vmatpush1.msra.mxu0 0.0
        %1226 = vmatprep.subr.mxu0 0.0
        %1227 = vmatpush1.msra.mxu0 0.0
        %1228 = vmatprep.subr.mxu0 0.0
        %1229 = vmatpush1.msra.mxu0 0.0
        %1230 = vmatprep.subr.mxu0 0.0
        %1231 = vmatpush1.msra.mxu0 0.0
        %1232 = vmatprep.subr.mxu0 0.0
        %1233 = vmatpush1.msra.mxu0 0.0
        %1234 = vmatprep.subr.mxu0 0.0
        %1235 = vmatpush1.msra.mxu0 0.0
        %1236 = vmatprep.subr.mxu0 0.0
        %1237 = vmatpush1.msra.mxu0 %v1201
        %1238 = vmatprep.subr.mxu0 0.0
        %1239 = vmatpush1.msra.mxu0 %v1200
        %1240 = vmatprep.subr.mxu0 0.0
        %1241 = vmatpush1.msra.mxu0 %v1199
        %1242 = vmatprep.subr.mxu0 0.0
        %1243 = vmatpush1.msra.mxu0 %v1198
        %1244 = vmatprep.subr.mxu0 0.0
        %1245 = vmatpush2.msra.mxu0 0.0
        %1246 = vmatprep.subr.mxu0 0.0
        %1247 = vmatpush2.msra.mxu0 0.0
        %1248 = vmatprep.subr.mxu0 0.0
        %1249 = vmatpush2.msra.mxu0 0.0
        %1250 = vmatprep.subr.mxu0 0.0
        %1251 = vmatpush2.msra.mxu0 0.0
        %1252 = vmatprep.subr.mxu0 0.0
        %1253 = vmatpush2.msra.mxu0 0.0
        %1254 = vmatprep.subr.mxu0 0.0
        %1255 = vmatpush2.msra.mxu0 0.0
        %1256 = vmatprep.subr.mxu0 0.0
        %1257 = vmatpush2.msra.mxu0 0.0
        %1258 = vmatprep.subr.mxu0 0.0
        %1259 = vmatpush2.msra.mxu0 0.0
        %1260 = vmatprep.subr.mxu0 0.0
        %1261 = vmatpush2.msra.mxu0 0.0
        %1262 = vmatprep.subr.mxu0 0.0
        %1263 = vmatpush2.msra.mxu0 0.0
        %1264 = vmatprep.subr.mxu0 0.0
        %1265 = vmatpush2.msra.mxu0 0.0
        %1266 = vmatprep.subr.mxu0 0.0
        %1267 = vmatpush2.msra.mxu0 0.0
        %1268 = vmatprep.subr.mxu0 0.0
        %1269 = vmatpush2.msra.mxu0 0.0
        %1270 = vmatprep.subr.mxu0 0.0
        %1271 = vmatpush2.msra.mxu0 0.0
        %1272 = vmatprep.subr.mxu0 0.0
        %1273 = vmatpush2.msra.mxu0 0.0
        %1274 = vmatprep.subr.mxu0 0.0
        %1275 = vmatpush2.msra.mxu0 0.0
        %1276 = vmatprep.mubr.f32.mxu0 0.0
        %1277 = vmatmul.mubr.f32.gmra.mxu0 %v1210
        %v1278 = vpop.f32.mrf.mxu0
        %v1279 = vadd.f32 %v1207, %v1278
        %v1280 = vpop.f32.mrf.mxu0
        %1281 = vdwg.mxu0
        %v1282 = vadd.f32 %v409, %v1279
        %v1283 = vld [vmem:[%s6] sm:$0x1]
        %v1284 = vld [vmem:[%s7] sm:$0x1]
        %v1285 = vsel %vm412, %v1282, 0.0
        %1286 = vadd.xlane.f32.xlu0 %v1285
        %v1287 = vpop.xlane.xlu0 %1286
        %v1288 = vmul.f32 %v1287, %v416
        %v1289 = vsub.f32 %v1282, %v1288
        %v1290 = vmul.f32 %v1289, %v1289
        %v1291 = vsel %vm412, %v1290, 0.0
        %1292 = vadd.xlane.f32.xlu0 %v1291
        %v1293 = vpop.xlane.xlu0 %1292
        %v1294 = vmul.f32 %v1293, %v416
        %v1295 = vadd.f32 %v1294, 1e-05
        %v1296 = vrsqrt.pop %v1295
        %v1297 = vmul.f32 %v1289, %v1296
        %v1299 = vlaneseq
        %v1300 = vshrl.u32 %v1299, 7
        %v1301 = vsub.s32 0, %v1300
        %v1302 = vrot.slane %v1283, %v1301
        %v1304 = vmul.f32 %v1297, %v1302
        %v1306 = vlaneseq
        %v1307 = vshrl.u32 %v1306, 7
        %v1308 = vsub.s32 0, %v1307
        %v1309 = vrot.slane %v1284, %v1308
        %v1311 = vadd.f32 %v1304, %v1309
        %v1312 = vld [vmem:[%s8] sm:$0xff]
        %v1313 = vld [vmem:[%s8 + $0x8] sm:$0xff]
        %v1314 = vld [vmem:[%s8 + $0x10] sm:$0xff]
        %v1315 = vld [vmem:[%s8 + $0x18] sm:$0xff]
        %v1316 = vld [vmem:[%s9] sm:$0x1]
        %v1318 = vlaneseq
        %v1319 = vshrl.u32 %v1318, 7
        %v1320 = vsub.s32 0, %v1319
        %v1321 = vrot.slane %v1316, %v1320
        %v1324 = vsel %vm412, %v1311, 0
        %1326 = vmatprep.subr.mxu0 0.0
        %1327 = vmatpush1.msra.mxu0 0.0
        %1328 = vmatprep.subr.mxu0 0.0
        %1329 = vmatpush1.msra.mxu0 0.0
        %1330 = vmatprep.subr.mxu0 0.0
        %1331 = vmatpush1.msra.mxu0 0.0
        %1332 = vmatprep.subr.mxu0 0.0
        %1333 = vmatpush1.msra.mxu0 0.0
        %1334 = vmatprep.subr.mxu0 0.0
        %1335 = vmatpush1.msra.mxu0 0.0
        %1336 = vmatprep.subr.mxu0 0.0
        %1337 = vmatpush1.msra.mxu0 0.0
        %1338 = vmatprep.subr.mxu0 0.0
        %1339 = vmatpush1.msra.mxu0 0.0
        %1340 = vmatprep.subr.mxu0 0.0
        %1341 = vmatpush1.msra.mxu0 0.0
        %1342 = vmatprep.subr.mxu0 0.0
        %1343 = vmatpush1.msra.mxu0 0.0
        %1344 = vmatprep.subr.mxu0 0.0
        %1345 = vmatpush1.msra.mxu0 0.0
        %1346 = vmatprep.subr.mxu0 0.0
        %1347 = vmatpush1.msra.mxu0 0.0
        %1348 = vmatprep.subr.mxu0 0.0
        %1349 = vmatpush1.msra.mxu0 0.0
        %1350 = vmatprep.subr.mxu0 0.0
        %1351 = vmatpush1.msra.mxu0 %v1315
        %1352 = vmatprep.subr.mxu0 0.0
        %1353 = vmatpush1.msra.mxu0 %v1314
        %1354 = vmatprep.subr.mxu0 0.0
        %1355 = vmatpush1.msra.mxu0 %v1313
        %1356 = vmatprep.subr.mxu0 0.0
        %1357 = vmatpush1.msra.mxu0 %v1312
        %1358 = vmatprep.subr.mxu0 0.0
        %1359 = vmatpush2.msra.mxu0 0.0
        %1360 = vmatprep.subr.mxu0 0.0
        %1361 = vmatpush2.msra.mxu0 0.0
        %1362 = vmatprep.subr.mxu0 0.0
        %1363 = vmatpush2.msra.mxu0 0.0
        %1364 = vmatprep.subr.mxu0 0.0
        %1365 = vmatpush2.msra.mxu0 0.0
        %1366 = vmatprep.subr.mxu0 0.0
        %1367 = vmatpush2.msra.mxu0 0.0
        %1368 = vmatprep.subr.mxu0 0.0
        %1369 = vmatpush2.msra.mxu0 0.0
        %1370 = vmatprep.subr.mxu0 0.0
        %1371 = vmatpush2.msra.mxu0 0.0
        %1372 = vmatprep.subr.mxu0 0.0
        %1373 = vmatpush2.msra.mxu0 0.0
        %1374 = vmatprep.subr.mxu0 0.0
        %1375 = vmatpush2.msra.mxu0 0.0
        %1376 = vmatprep.subr.mxu0 0.0
        %1377 = vmatpush2.msra.mxu0 0.0
        %1378 = vmatprep.subr.mxu0 0.0
        %1379 = vmatpush2.msra.mxu0 0.0
        %1380 = vmatprep.subr.mxu0 0.0
        %1381 = vmatpush2.msra.mxu0 0.0
        %1382 = vmatprep.subr.mxu0 0.0
        %1383 = vmatpush2.msra.mxu0 0.0
        %1384 = vmatprep.subr.mxu0 0.0
        %1385 = vmatpush2.msra.mxu0 0.0
        %1386 = vmatprep.subr.mxu0 0.0
        %1387 = vmatpush2.msra.mxu0 0.0
        %1388 = vmatprep.subr.mxu0 0.0
        %1389 = vmatpush2.msra.mxu0 0.0
        %1390 = vmatprep.mubr.f32.mxu0 0.0
        %1391 = vmatmul.mubr.f32.gmra.mxu0 %v1324
        %v1392 = vpop.f32.mrf.mxu0
        %v1393 = vadd.f32 %v1321, %v1392
        %v1394 = vpop.f32.mrf.mxu0
        %1395 = vdwg.mxu0
        %v1396 = vmul.f32 %v1393, 0.5
        %v1397 = vmul.f32 %v1393, 0.70710677
        %vm1398 = vcmp.lt.f32.partialorder %v1397, 0.0
        %v1399 = vsel %vm1398, -1.0, 1.0
        %v1400 = vand.u32 2147483647, %v1397
        %v1401 = vmul.f32 %v1400, 0.3275911
        %v1402 = vadd.f32 %v1401, 1.0
        %v1403 = vrcp.pop %v1402
        %v1404 = vmul.f32 1.0, %v1403
        %v1405 = vmul.f32 %v1404, 1.0614054
        %v1406 = vadd.f32 %v1405, -1.4531521
        %v1407 = vmul.f32 %v1406, %v1404
        %v1408 = vadd.f32 %v1407, 1.4214138
        %v1409 = vmul.f32 %v1408, %v1404
        %v1410 = vadd.f32 %v1409, -0.28449672
        %v1411 = vmul.f32 %v1410, %v1404
        %v1412 = vadd.f32 %v1411, 0.2548296
        %v1413 = vmul.f32 %v1412, %v1404
        %v1414 = vmul.f32 %v1400, %v1400
        %v1415 = vsub.f32 0.0, %v1414
        %v1416 = vmul.f32 %v1415, 1.442695
        %v1417 = vpow.pop %v1416
        %v1418 = vmul.f32 %v1413, %v1417
        %v1419 = vsub.f32 1.0, %v1418
        %v1420 = vmul.f32 %v1399, %v1419
        %v1421 = vadd.f32 %v1420, 1.0
        %v1422 = vmul.f32 %v1396, %v1421
        %v1423 = vld [vmem:[%s10] sm:$0xff]
        %v1424 = vld [vmem:[%s10 + $0x8] sm:$0xff]
        %v1425 = vld [vmem:[%s10 + $0x10] sm:$0xff]
        %v1426 = vld [vmem:[%s10 + $0x18] sm:$0xff]
        %v1427 = vld [vmem:[%s10 + $0x20] sm:$0xff]
        %v1428 = vld [vmem:[%s10 + $0x28] sm:$0xff]
        %v1429 = vld [vmem:[%s10 + $0x30] sm:$0xff]
        %v1430 = vld [vmem:[%s10 + $0x38] sm:$0xff]
        %v1431 = vld [vmem:[%s10 + $0x40] sm:$0xff]
        %v1432 = vld [vmem:[%s10 + $0x48] sm:$0xff]
        %v1433 = vld [vmem:[%s10 + $0x50] sm:$0xff]
        %v1434 = vld [vmem:[%s10 + $0x58] sm:$0xff]
        %v1435 = vld [vmem:[%s10 + $0x60] sm:$0xff]
        %v1436 = vld [vmem:[%s10 + $0x68] sm:$0xff]
        %v1437 = vld [vmem:[%s10 + $0x70] sm:$0xff]
        %v1438 = vld [vmem:[%s10 + $0x78] sm:$0xff]
        %v1439 = vld [vmem:[%s11] sm:$0x1]
        %v1441 = vlaneseq
        %v1442 = vshrl.u32 %v1441, 7
        %v1443 = vsub.s32 0, %v1442
        %v1444 = vrot.slane %v1439, %v1443
        %1446 = vmatprep.subr.mxu0 0.0
        %1447 = vmatpush1.msra.mxu0 %v1438
        %1448 = vmatprep.subr.mxu0 0.0
        %1449 = vmatpush1.msra.mxu0 %v1437
        %1450 = vmatprep.subr.mxu0 0.0
        %1451 = vmatpush1.msra.mxu0 %v1436
        %1452 = vmatprep.subr.mxu0 0.0
        %1453 = vmatpush1.msra.mxu0 %v1435
        %1454 = vmatprep.subr.mxu0 0.0
        %1455 = vmatpush1.msra.mxu0 %v1434
        %1456 = vmatprep.subr.mxu0 0.0
        %1457 = vmatpush1.msra.mxu0 %v1433
        %1458 = vmatprep.subr.mxu0 0.0
        %1459 = vmatpush1.msra.mxu0 %v1432
        %1460 = vmatprep.subr.mxu0 0.0
        %1461 = vmatpush1.msra.mxu0 %v1431
        %1462 = vmatprep.subr.mxu0 0.0
        %1463 = vmatpush1.msra.mxu0 %v1430
        %1464 = vmatprep.subr.mxu0 0.0
        %1465 = vmatpush1.msra.mxu0 %v1429
        %1466 = vmatprep.subr.mxu0 0.0
        %1467 = vmatpush1.msra.mxu0 %v1428
        %1468 = vmatprep.subr.mxu0 0.0
        %1469 = vmatpush1.msra.mxu0 %v1427
        %1470 = vmatprep.subr.mxu0 0.0
        %1471 = vmatpush1.msra.mxu0 %v1426
        %1472 = vmatprep.subr.mxu0 0.0
        %1473 = vmatpush1.msra.mxu0 %v1425
        %1474 = vmatprep.subr.mxu0 0.0
        %1475 = vmatpush1.msra.mxu0 %v1424
        %1476 = vmatprep.subr.mxu0 0.0
        %1477 = vmatpush1.msra.mxu0 %v1423
        %1478 = vmatprep.subr.mxu0 0.0
        %1479 = vmatpush2.msra.mxu0 0.0
        %1480 = vmatprep.subr.mxu0 0.0
        %1481 = vmatpush2.msra.mxu0 0.0
        %1482 = vmatprep.subr.mxu0 0.0
        %1483 = vmatpush2.msra.mxu0 0.0
        %1484 = vmatprep.subr.mxu0 0.0
        %1485 = vmatpush2.msra.mxu0 0.0
        %1486 = vmatprep.subr.mxu0 0.0
        %1487 = vmatpush2.msra.mxu0 0.0
        %1488 = vmatprep.subr.mxu0 0.0
        %1489 = vmatpush2.msra.mxu0 0.0
        %1490 = vmatprep.subr.mxu0 0.0
        %1491 = vmatpush2.msra.mxu0 0.0
        %1492 = vmatprep.subr.mxu0 0.0
        %1493 = vmatpush2.msra.mxu0 0.0
        %1494 = vmatprep.subr.mxu0 0.0
        %1495 = vmatpush2.msra.mxu0 0.0
        %1496 = vmatprep.subr.mxu0 0.0
        %1497 = vmatpush2.msra.mxu0 0.0
        %1498 = vmatprep.subr.mxu0 0.0
        %1499 = vmatpush2.msra.mxu0 0.0
        %1500 = vmatprep.subr.mxu0 0.0
        %1501 = vmatpush2.msra.mxu0 0.0
        %1502 = vmatprep.subr.mxu0 0.0
        %1503 = vmatpush2.msra.mxu0 0.0
        %1504 = vmatprep.subr.mxu0 0.0
        %1505 = vmatpush2.msra.mxu0 0.0
        %1506 = vmatprep.subr.mxu0 0.0
        %1507 = vmatpush2.msra.mxu0 0.0
        %1508 = vmatprep.subr.mxu0 0.0
        %1509 = vmatpush2.msra.mxu0 0.0
        %1510 = vmatprep.mubr.f32.mxu0 0.0
        %1511 = vmatmul.mubr.f32.gmra.mxu0 %v1422
        %v1512 = vpop.f32.mrf.mxu0
        %v1513 = vadd.f32 %v1444, %v1512
        %v1514 = vpop.f32.mrf.mxu0
        %1515 = vdwg.mxu0
        %v1516 = vmul.f32 %v1513, 0.5
        %v1517 = vmul.f32 %v1513, 0.70710677
        %vm1518 = vcmp.lt.f32.partialorder %v1517, 0.0
        %v1519 = vsel %vm1518, -1.0, 1.0
        %v1520 = vand.u32 2147483647, %v1517
        %v1521 = vmul.f32 %v1520, 0.3275911
        %v1522 = vadd.f32 %v1521, 1.0
        %v1523 = vrcp.pop %v1522
        %v1524 = vmul.f32 1.0, %v1523
        %v1525 = vmul.f32 %v1524, 1.0614054
        %v1526 = vadd.f32 %v1525, -1.4531521
        %v1527 = vmul.f32 %v1526, %v1524
        %v1528 = vadd.f32 %v1527, 1.4214138
        %v1529 = vmul.f32 %v1528, %v1524
        %v1530 = vadd.f32 %v1529, -0.28449672
        %v1531 = vmul.f32 %v1530, %v1524
        %v1532 = vadd.f32 %v1531, 0.2548296
        %v1533 = vmul.f32 %v1532, %v1524
        %v1534 = vmul.f32 %v1520, %v1520
        %v1535 = vsub.f32 0.0, %v1534
        %v1536 = vmul.f32 %v1535, 1.442695
        %v1537 = vpow.pop %v1536
        %v1538 = vmul.f32 %v1533, %v1537
        %v1539 = vsub.f32 1.0, %v1538
        %v1540 = vmul.f32 %v1519, %v1539
        %v1541 = vadd.f32 %v1540, 1.0
        %v1542 = vmul.f32 %v1516, %v1541
        %v1543 = vadd.f32 %v1282, %v1542
        %1544 = vst.msk [vmem:[%s404] sm:$0xff] %vm412, %v1543
        %s1545 = sand.u32 %s291, 1
        %s1546 = scalar_lea.sflag [#allocation4], %s1545
        %s1547 = sand.u32 %s291, 1
        %s1548 = smul.addr %s1547, 8
        %s1549 = scalar_lea.vmem [#allocation3], %s1548
        // Predicated region
        $region69: #{tpu_custom_call.1} parent=67 // pred_check
          %p1550 = pneg %p301
        $region70: #{tpu_custom_call.1} parent=67 // pred_check_branch
          %1552 = sbr.rel (%p1550) target = $region72
        $region71: #{tpu_custom_call.1} parent=67 // pred_region
          %s1554 = ssub.s32 128, 128
          %1555 = vsyncadd %s1546, %s1554
          %s1556 = smul.addr %s26, 128
          %s1557 = scalar_lea.hbm %s12, %s1556
          %s1559 = sshll.u32 %s1549, 4
          %s1560 = int_to_ptr.vmem [resolvable:$true] %s1559
          %1562 = dma.vmem_to_hbm [thread:$0]  %s1560, 128, %s1557, %s1546
        $region72: #{tpu_custom_call.1} parent=67 // pred_fallthru
          _
      $region68: #{tpu_custom_call.1} parent=5 // pred_fallthru
        _
      %p1563 = scmp.le.s32.totalorder 2, %s21
      // Predicated region
      $region73: #{tpu_custom_call.1} parent=5 // pred_check
        %p1564 = pneg %p1563
      $region74: #{tpu_custom_call.1} parent=5 // pred_check_branch
        %1566 = sbr.rel (%p1564) target = $region76
      $region75: #{tpu_custom_call.1} parent=5 // pred_region
        %s1567 = ssub.s32 %s21, 2
        // Predicated region
        $region77: #{tpu_custom_call.1} parent=75 // pred_check
          %p1568 = pneg %p307
        $region78: #{tpu_custom_call.1} parent=75 // pred_check_branch
          %1570 = sbr.rel (%p1568) target = $region80
        $region79: #{tpu_custom_call.1} parent=75 // pred_region
          %s1571 = sand.u32 %s292, 1
          %s1572 = scalar_lea.sflag [#allocation4], %s1571
          %s1573 = sand.u32 %s292, 1
          %s1574 = smul.addr %s1573, 8
          %s1575 = scalar_lea.vmem [#allocation3], %s1574
          %1576 = dma.done %s1572, 128
        $region80: #{tpu_custom_call.1} parent=75 // pred_fallthru
          _
      $region76: #{tpu_custom_call.1} parent=5 // pred_fallthru
        _
    $region6: #{tpu_custom_call.1} parent=1 // loop_footer
      %s25 = sadd.s32 1, %s21
    $region7: #{tpu_custom_call.1} parent=1 // loop_footer_branch
      %20 = sbr.rel target = $region3
    $region8: #{tpu_custom_call.1} parent=1 // loop_exit
      _
    %1577 = vsyncpa [#allocation4], 1
    %s1578 = scalar_lea.sflag [#allocation4], 1
    %1579 = vsyncpa %s1578, 1

</llo_original>
